<compile_context>
chip_gen: v7x
topology: tpu7x:2x2x1
jax: 0.10.0
libtpu: 0.0.40
codegen_flags: <defaults>
</compile_context>

<pallas_src>
import jax
import jax.numpy as jnp
from jax.experimental import pallas as pl
from jax.experimental.pallas import tpu as pltpu


def _round_up(x, m):
    return (x + m - 1) // m * m


def _choose_m_tiling(mc, tile_max=2048):
    """Pick (padded_M, tile_m) for a lane axis of logical length mc.

    Goals (per perf review): 128-aligned lane-dense tiles, tile up to
    `tile_max`, >=2 grid steps whenever there is >=2 tiles of work (so the
    "parallel" grid axis can shard across v7x's two TensorCores), and zero
    extra padding when an exact 128-aligned split exists.
    """
    mp0 = _round_up(mc, 128)
    units = mp0 // 128
    min_steps = 2 if units >= 2 else 1
    steps = max(min_steps, -(-mp0 // tile_max))
    # Prefer an exact split (no padding beyond the 128 round-up).
    for s in range(steps, min(steps + 8, units) + 1):
        if units % s == 0:
            return mp0, mp0 // s
    # Fall back: round each tile to 128 (adds <128 lanes of pad per tile).
    tm = _round_up(-(-mc // steps), 128)
    return steps * tm, tm


# ---------------------------------------------------------------------------
# Pallas kernels
# ---------------------------------------------------------------------------
def _conv_relu_pool_kernel(w_ref, b_ref, p00_ref, p01_ref, p10_ref, p11_ref,
                           o_ref):
    """Fused conv-as-GEMM + bias + ReLU + 2x2 max-pool.

    w: (Cout, K) bf16, b: (Cout, 1) f32, p_dd: (K, TM) bf16 (one per pooling
    corner), o: (Cout, TM) bf16.  Uses max_c(relu(z_c + b)) == relu(max_c(z_c) + b)
    since the bias is corner-independent and ReLU is monotonic.
    """
    def corner(p_ref):
        return jnp.dot(w_ref[...], p_ref[...],
                       preferred_element_type=jnp.float32)

    m = jnp.maximum(jnp.maximum(corner(p00_ref), corner(p01_ref)),
                    jnp.maximum(corner(p10_ref), corner(p11_ref)))
    o_ref[...] = jnp.maximum(m + b_ref[...], 0.0).astype(o_ref.dtype)


def _fc_stack_kernel(x_ref, w1_ref, b1_ref, w2_ref, b2_ref, w3_ref, b3_ref,
                     o_ref):
    """fc1+ReLU -> fc2+ReLU -> fc3 fused, W @ X layout (batch on lanes).

    x: (256, TN) bf16, wI: (out, in) bf16, bI: (out, 1) f32, o: (10, TN) f32.
    Matmul inputs bf16, accumulation and bias/ReLU epilogues f32.
    """
    h = jnp.dot(w1_ref[...], x_ref[...], preferred_element_type=jnp.float32)
    h = jnp.maximum(h + b1_ref[...], 0.0)
    h = jnp.dot(w2_ref[...], h.astype(jnp.bfloat16),
                preferred_element_type=jnp.float32)
    h = jnp.maximum(h + b2_ref[...], 0.0)
    y = jnp.dot(w3_ref[...], h.astype(jnp.bfloat16),
                preferred_element_type=jnp.float32)
    o_ref[...] = y + b3_ref[...]


# ---------------------------------------------------------------------------
# Conv + ReLU + 2x2 max-pool (fused) wrapper
# ---------------------------------------------------------------------------
def _im2col_pool_corners(x_cnhw, kh, kw):
    """x: (Cin, N, H, W) bf16 -> four corner patch matrices (Cin*kh*kw, N*Hp*Wp).

    Row k = ci*kh*kw + i*kw + j matches PyTorch's Conv2d weight flattening.
    Corner (dh, dw) holds the im2col patches of conv-output pixels
    (2*hp + dh, 2*wp + dw), i.e. the four members of each 2x2 pooling window.
    Built directly with strided slices (no full-resolution intermediate), in
    bf16, to minimize the XLA-materialized im2col bytes.
    """
    C, N, H, W = x_cnhw.shape
    Ho, Wo = H - kh + 1, W - kw + 1
    assert Ho % 2 == 0 and Wo % 2 == 0, "2x2 pool assumes even conv output dims"
    Hp, Wp = Ho // 2, Wo // 2
    K = C * kh * kw
    corners = []
    for dh in (0, 1):
        for dw in (0, 1):
            slabs = [x_cnhw[:, :, dh + i: dh + i + Ho: 2, dw + j: dw + j + Wo: 2]
                     for i in range(kh) for j in range(kw)]     # each (C,N,Hp,Wp)
            corners.append(jnp.stack(slabs, axis=1).reshape(K, N * Hp * Wp))
    return corners, Hp, Wp


def conv_relu_pool_pallas(x_cnhw, w_mat, b_col, kh, kw, *, tile_m=2048):
    """PyTorch Conv2d(stride=1, no pad) + ReLU + MaxPool2d(2, 2), fused.

    x: (Cin, N, H, W), w_mat: (Cout, Cin*kh*kw) bf16, b_col: (Cout, 1) f32.
    Returns the pooled map in bf16, channel-major layout (Cout, N, Hp, Wp),
    ready to feed the next conv without a transpose.
    """
    x_cnhw = x_cnhw.astype(jnp.bfloat16)       # cast BEFORE any im2col slicing
    C, N, H, W = x_cnhw.shape
    Cout, K = w_mat.shape
    corners, Hp, Wp = _im2col_pool_corners(x_cnhw, kh, kw)
    Mc = N * Hp * Wp
    Mp, tm = _choose_m_tiling(Mc, tile_m)      # >=2 grid steps, minimal padding
    corners = [jnp.pad(c, ((0, 0), (0, Mp - Mc))) for c in corners]

    out = pl.pallas_call(
        _conv_relu_pool_kernel,
        out_shape=jax.ShapeDtypeStruct((Cout, Mp), jnp.bfloat16),
        grid=(Mp // tm,),
        in_specs=[
            pl.BlockSpec((Cout, K), lambda i: (0, 0)),   # weights: resident
            pl.BlockSpec((Cout, 1), lambda i: (0, 0)),   # bias: resident
        ] + [pl.BlockSpec((K, tm), lambda i: (0, i)) for _ in range(4)],
        out_specs=pl.BlockSpec((Cout, tm), lambda i: (0, i)),
        compiler_params=pltpu.CompilerParams(
            dimension_semantics=("parallel",),           # megacore split on v7x
            vmem_limit_bytes=32 * 1024 * 1024,           # safe on v5e/v6e/v7x
        ),
    )(w_mat, b_col, *corners)
    return out[:, :Mc].reshape(Cout, N, Hp, Wp)


# ---------------------------------------------------------------------------
# Fused FC stack wrapper (W @ X layout, grid over batch)
# ---------------------------------------------------------------------------
def fc_stack_pallas(flat_t, prep, *, tile_n=2048):
    """flat_t: (256, N) bf16 (feature-major, batch on lanes) -> logits (N, 10) f32."""
    F, N = flat_t.shape
    n_out = prep["fc3_w"].shape[0]
    Np, tn = _choose_m_tiling(N, tile_n)
    x = jnp.pad(flat_t, ((0, 0), (0, Np - N)))
    w1, b1 = prep["fc1_w"], prep["fc1_b"]
    w2, b2 = prep["fc2_w"], prep["fc2_b"]
    w3, b3 = prep["fc3_w"], prep["fc3_b"]

    out = pl.pallas_call(
        _fc_stack_kernel,
        out_shape=jax.ShapeDtypeStruct((n_out, Np), jnp.float32),
        grid=(Np // tn,),
        in_specs=[
            pl.BlockSpec((F, tn), lambda i: (0, i)),       # activations: tiled
            pl.BlockSpec(w1.shape, lambda i: (0, 0)),      # weights/bias resident
            pl.BlockSpec(b1.shape, lambda i: (0, 0)),
            pl.BlockSpec(w2.shape, lambda i: (0, 0)),
            pl.BlockSpec(b2.shape, lambda i: (0, 0)),
            pl.BlockSpec(w3.shape, lambda i: (0, 0)),
            pl.BlockSpec(b3.shape, lambda i: (0, 0)),
        ],
        out_specs=pl.BlockSpec((n_out, tn), lambda i: (0, i)),  # lane-dense in N
        compiler_params=pltpu.CompilerParams(
            dimension_semantics=("parallel",),
            vmem_limit_bytes=32 * 1024 * 1024,
        ),
    )(x, w1, b1, w2, b2, w3, b3)
    return out[:, :N].T                                    # (N, 10) f32


# ---------------------------------------------------------------------------
# Parameters
# ---------------------------------------------------------------------------
def init_params(key):
    ks = jax.random.split(key, 10)
    return {
        "conv1_w": 0.1 * jax.random.normal(ks[0], (6, 1, 5, 5), jnp.float32),
        "conv1_b": 0.1 * jax.random.normal(ks[1], (6,), jnp.float32),
        "conv2_w": 0.1 * jax.random.normal(ks[2], (16, 6, 5, 5), jnp.float32),
        "conv2_b": 0.1 * jax.random.normal(ks[3], (16,), jnp.float32),
        "fc1_w": 0.1 * jax.random.normal(ks[4], (120, 256), jnp.float32),
        "fc1_b": 0.1 * jax.random.normal(ks[5], (120,), jnp.float32),
        "fc2_w": 0.1 * jax.random.normal(ks[6], (84, 120), jnp.float32),
        "fc2_b": 0.1 * jax.random.normal(ks[7], (84,), jnp.float32),
        "fc3_w": 0.1 * jax.random.normal(ks[8], (10, 84), jnp.float32),
        "fc3_b": 0.1 * jax.random.normal(ks[9], (10,), jnp.float32),
    }


def prepare_params(params):
    """One-time layout prep (reshape / bf16 cast), outside the per-step path.

    FC weights stay in PyTorch (out, in) orientation because the FC kernel
    runs W @ X with the batch on the lane axis.
    """
    return {
        "conv1_w": params["conv1_w"].reshape(6, -1).astype(jnp.bfloat16),
        "conv1_b": params["conv1_b"].reshape(6, 1).astype(jnp.float32),
        "conv2_w": params["conv2_w"].reshape(16, -1).astype(jnp.bfloat16),
        "conv2_b": params["conv2_b"].reshape(16, 1).astype(jnp.float32),
        "fc1_w": params["fc1_w"].astype(jnp.bfloat16),            # (120, 256)
        "fc1_b": params["fc1_b"].reshape(-1, 1).astype(jnp.float32),
        "fc2_w": params["fc2_w"].astype(jnp.bfloat16),            # (84, 120)
        "fc2_b": params["fc2_b"].reshape(-1, 1).astype(jnp.float32),
        "fc3_w": params["fc3_w"].astype(jnp.bfloat16),            # (10, 84)
        "fc3_b": params["fc3_b"].reshape(-1, 1).astype(jnp.float32),
    }


# ---------------------------------------------------------------------------
# Net forward (mirrors the PyTorch module)
# ---------------------------------------------------------------------------
@jax.jit
def net_forward(x, prep):
    N = x.shape[0]
    # NCHW -> (C, N, H, W), bf16 before any im2col materialization.
    xc = jnp.transpose(x, (1, 0, 2, 3)).astype(jnp.bfloat16)
    # conv1(1->6, 5x5) + ReLU + pool(2,2), fused:   -> (6, N, 12, 12) bf16
    y = conv_relu_pool_pallas(xc, prep["conv1_w"], prep["conv1_b"], 5, 5)
    # conv2(6->16, 5x5) + ReLU + pool(2,2), fused:  -> (16, N, 4, 4) bf16
    y = conv_relu_pool_pallas(y, prep["conv2_w"], prep["conv2_b"], 5, 5)
    # PyTorch x.view(-1, 16*4*4) flattens features in (c, h, w) order; keep the
    # batch on the 128-lane axis (W @ X layout) so FC stores are lane-dense.
    flat_t = jnp.transpose(y, (0, 2, 3, 1)).reshape(16 * 4 * 4, N)  # (256, N) bf16
    logits = fc_stack_pallas(flat_t, prep)                          # (N, 10) f32
    # TODO(synk): the PyTorch forward also returns Python-side timing counters
    # (slice/dot/sum times) from its custom Conv2d; no tensor compute backs
    # them, so they are returned as zeros.
    zero = jnp.float32(0.0)
    return logits, zero, zero, zero


if __name__ == "__main__":
    key = jax.random.PRNGKey(0)
    pkey, xkey = jax.random.split(key)
    params = init_params(pkey)
    prep = prepare_params(params)          # one-time, outside the per-step path
    # MNIST-style input: fc1's 16*4*4 implies a 28x28 single-channel image.
    x = jax.random.normal(xkey, (2, 1, 28, 28), jnp.float32)

    logits, st, dt, su = net_forward(x, prep)
    jax.block_until_ready(logits)
    assert logits.shape == (2, 10)
    assert bool(jnp.all(jnp.isfinite(logits)))
    print("KERNEL_OK")
</pallas_src>

<mosaic_0001>
module attributes {stable_mosaic.version = 11 : i64} {
  func.func @_conv_relu_pool_kernel(%arg0: i32, %arg1: memref<6x25xbf16, #tpu.memory_space<vmem>>, %arg2: memref<6x1xf32, #tpu.memory_space<vmem>>, %arg3: memref<25x128xbf16, #tpu.memory_space<vmem>>, %arg4: memref<25x128xbf16, #tpu.memory_space<vmem>>, %arg5: memref<25x128xbf16, #tpu.memory_space<vmem>>, %arg6: memref<25x128xbf16, #tpu.memory_space<vmem>>, %arg7: memref<6x128xbf16, #tpu.memory_space<vmem>>) attributes {dimension_semantics = [#tpu.dimension_semantics<parallel>], iteration_bounds = array<i64: 3>, scalar_prefetch = 0 : i64, scratch_operands = 0 : i64, tpu.core_type = #tpu.core_type<tc>, window_params = [{pipeline_mode = #tpu.pipeline_mode<synchronous>, transform_indices = @transform_0, window_bounds = array<i64: 6, 25>}, {pipeline_mode = #tpu.pipeline_mode<synchronous>, transform_indices = @transform_1, window_bounds = array<i64: 6, 1>}, {transform_indices = @transform_2, window_bounds = array<i64: 25, 128>}, {transform_indices = @transform_3, window_bounds = array<i64: 25, 128>}, {transform_indices = @transform_4, window_bounds = array<i64: 25, 128>}, {transform_indices = @transform_5, window_bounds = array<i64: 25, 128>}, {transform_indices = @transform_6, window_bounds = array<i64: 6, 128>}]} {
    %c0 = arith.constant 0 : index
    %c0_0 = arith.constant 0 : index
    %0 = vector.load %arg1[%c0, %c0_0] : memref<6x25xbf16, #tpu.memory_space<vmem>>, vector<6x25xbf16>
    %c0_1 = arith.constant 0 : index
    %c0_2 = arith.constant 0 : index
    %1 = vector.load %arg3[%c0_1, %c0_2] : memref<25x128xbf16, #tpu.memory_space<vmem>>, vector<25x128xbf16>
    %cst = arith.constant dense<0.000000e+00> : vector<6x128xf32>
    %2 = tpu.matmul %0, %1, %cst {dimension_numbers = #tpu.dot_dimension_numbers<[1], [0], [0], [1], [0, 0, 1, 1], [], []>} : vector<6x25xbf16>, vector<25x128xbf16>, vector<6x128xf32> -> vector<6x128xf32>
    %c0_3 = arith.constant 0 : index
    %c0_4 = arith.constant 0 : index
    %3 = vector.load %arg1[%c0_3, %c0_4] : memref<6x25xbf16, #tpu.memory_space<vmem>>, vector<6x25xbf16>
    %c0_5 = arith.constant 0 : index
    %c0_6 = arith.constant 0 : index
    %4 = vector.load %arg4[%c0_5, %c0_6] : memref<25x128xbf16, #tpu.memory_space<vmem>>, vector<25x128xbf16>
    %cst_7 = arith.constant dense<0.000000e+00> : vector<6x128xf32>
    %5 = tpu.matmul %3, %4, %cst_7 {dimension_numbers = #tpu.dot_dimension_numbers<[1], [0], [0], [1], [0, 0, 1, 1], [], []>} : vector<6x25xbf16>, vector<25x128xbf16>, vector<6x128xf32> -> vector<6x128xf32>
    %6 = arith.maximumf %2, %5 : vector<6x128xf32>
    %c0_8 = arith.constant 0 : index
    %c0_9 = arith.constant 0 : index
    %7 = vector.load %arg1[%c0_8, %c0_9] : memref<6x25xbf16, #tpu.memory_space<vmem>>, vector<6x25xbf16>
    %c0_10 = arith.constant 0 : index
    %c0_11 = arith.constant 0 : index
    %8 = vector.load %arg5[%c0_10, %c0_11] : memref<25x128xbf16, #tpu.memory_space<vmem>>, vector<25x128xbf16>
    %cst_12 = arith.constant dense<0.000000e+00> : vector<6x128xf32>
    %9 = tpu.matmul %7, %8, %cst_12 {dimension_numbers = #tpu.dot_dimension_numbers<[1], [0], [0], [1], [0, 0, 1, 1], [], []>} : vector<6x25xbf16>, vector<25x128xbf16>, vector<6x128xf32> -> vector<6x128xf32>
    %c0_13 = arith.constant 0 : index
    %c0_14 = arith.constant 0 : index
    %10 = vector.load %arg1[%c0_13, %c0_14] : memref<6x25xbf16, #tpu.memory_space<vmem>>, vector<6x25xbf16>
    %c0_15 = arith.constant 0 : index
    %c0_16 = arith.constant 0 : index
    %11 = vector.load %arg6[%c0_15, %c0_16] : memref<25x128xbf16, #tpu.memory_space<vmem>>, vector<25x128xbf16>
    %cst_17 = arith.constant dense<0.000000e+00> : vector<6x128xf32>
    %12 = tpu.matmul %10, %11, %cst_17 {dimension_numbers = #tpu.dot_dimension_numbers<[1], [0], [0], [1], [0, 0, 1, 1], [], []>} : vector<6x25xbf16>, vector<25x128xbf16>, vector<6x128xf32> -> vector<6x128xf32>
    %13 = arith.maximumf %9, %12 : vector<6x128xf32>
    %14 = arith.maximumf %6, %13 : vector<6x128xf32>
    %c0_18 = arith.constant 0 : index
    %c0_19 = arith.constant 0 : index
    %15 = vector.load %arg2[%c0_18, %c0_19] : memref<6x1xf32, #tpu.memory_space<vmem>>, vector<6x1xf32>
    %16 = vector.broadcast %15 : vector<6x1xf32> to vector<6x128xf32>
    %17 = arith.addf %14, %16 : vector<6x128xf32>
    %cst_20 = arith.constant 0.000000e+00 : f32
    %18 = vector.broadcast %cst_20 : f32 to vector<6x128xf32>
    %19 = arith.maximumf %17, %18 : vector<6x128xf32>
    %20 = arith.truncf %19 : vector<6x128xf32> to vector<6x128xbf16>
    %c0_21 = arith.constant 0 : index
    %c0_22 = arith.constant 0 : index
    %21 = vector.load %arg7[%c0_21, %c0_22] : memref<6x128xbf16, #tpu.memory_space<vmem>>, vector<6x128xbf16>
    tpu.vector_store %arg7[%c0_21, %c0_22], %20 {strides = array<i32>} : memref<6x128xbf16, #tpu.memory_space<vmem>>, vector<6x128xbf16>,
    return
  }
  func.func @transform_0(%arg0: i32) -> (i32, i32) {
    %c0_i32 = arith.constant 0 : i32
    %c0_i32_0 = arith.constant 0 : i32
    %c0_i32_1 = arith.constant 0 : i32
    return %c0_i32, %c0_i32_0 : i32, i32
  }
  func.func @transform_1(%arg0: i32) -> (i32, i32) {
    %c0_i32 = arith.constant 0 : i32
    %c0_i32_0 = arith.constant 0 : i32
    %c0_i32_1 = arith.constant 0 : i32
    return %c0_i32, %c0_i32_0 : i32, i32
  }
  func.func @transform_2(%arg0: i32) -> (i32, i32) {
    %c0_i32 = arith.constant 0 : i32
    %c0_i32_0 = arith.constant 0 : i32
    return %c0_i32, %arg0 : i32, i32
  }
  func.func @transform_3(%arg0: i32) -> (i32, i32) {
    %c0_i32 = arith.constant 0 : i32
    %c0_i32_0 = arith.constant 0 : i32
    return %c0_i32, %arg0 : i32, i32
  }
  func.func @transform_4(%arg0: i32) -> (i32, i32) {
    %c0_i32 = arith.constant 0 : i32
    %c0_i32_0 = arith.constant 0 : i32
    return %c0_i32, %arg0 : i32, i32
  }
  func.func @transform_5(%arg0: i32) -> (i32, i32) {
    %c0_i32 = arith.constant 0 : i32
    %c0_i32_0 = arith.constant 0 : i32
    return %c0_i32, %arg0 : i32, i32
  }
  func.func @transform_6(%arg0: i32) -> (i32, i32) {
    %c0_i32 = arith.constant 0 : i32
    %c0_i32_0 = arith.constant 0 : i32
    return %c0_i32, %arg0 : i32, i32
  }
}

module attributes {stable_mosaic.version = 11 : i64} {
  func.func @_conv_relu_pool_kernel(%arg0: i32, %arg1: memref<16x150xbf16, #tpu.memory_space<vmem>>, %arg2: memref<16x1xf32, #tpu.memory_space<vmem>>, %arg3: memref<150x128xbf16, #tpu.memory_space<vmem>>, %arg4: memref<150x128xbf16, #tpu.memory_space<vmem>>, %arg5: memref<150x128xbf16, #tpu.memory_space<vmem>>, %arg6: memref<150x128xbf16, #tpu.memory_space<vmem>>, %arg7: memref<16x128xbf16, #tpu.memory_space<vmem>>) attributes {dimension_semantics = [#tpu.dimension_semantics<parallel>], iteration_bounds = array<i64: 1>, scalar_prefetch = 0 : i64, scratch_operands = 0 : i64, tpu.core_type = #tpu.core_type<tc>, window_params = [{pipeline_mode = #tpu.pipeline_mode<synchronous>, transform_indices = @transform_0, window_bounds = array<i64: 16, 150>}, {pipeline_mode = #tpu.pipeline_mode<synchronous>, transform_indices = @transform_1, window_bounds = array<i64: 16, 1>}, {transform_indices = @transform_2, window_bounds = array<i64: 150, 128>}, {transform_indices = @transform_3, window_bounds = array<i64: 150, 128>}, {transform_indices = @transform_4, window_bounds = array<i64: 150, 128>}, {transform_indices = @transform_5, window_bounds = array<i64: 150, 128>}, {transform_indices = @transform_6, window_bounds = array<i64: 16, 128>}]} {
    %c0 = arith.constant 0 : index
    %c0_0 = arith.constant 0 : index
    %0 = vector.load %arg1[%c0, %c0_0] : memref<16x150xbf16, #tpu.memory_space<vmem>>, vector<16x150xbf16>
    %c0_1 = arith.constant 0 : index
    %c0_2 = arith.constant 0 : index
    %1 = vector.load %arg3[%c0_1, %c0_2] : memref<150x128xbf16, #tpu.memory_space<vmem>>, vector<150x128xbf16>
    %cst = arith.constant dense<0.000000e+00> : vector<16x128xf32>
    %2 = tpu.matmul %0, %1, %cst {dimension_numbers = #tpu.dot_dimension_numbers<[1], [0], [0], [1], [0, 0, 1, 1], [], []>} : vector<16x150xbf16>, vector<150x128xbf16>, vector<16x128xf32> -> vector<16x128xf32>
    %c0_3 = arith.constant 0 : index
    %c0_4 = arith.constant 0 : index
    %3 = vector.load %arg1[%c0_3, %c0_4] : memref<16x150xbf16, #tpu.memory_space<vmem>>, vector<16x150xbf16>
    %c0_5 = arith.constant 0 : index
    %c0_6 = arith.constant 0 : index
    %4 = vector.load %arg4[%c0_5, %c0_6] : memref<150x128xbf16, #tpu.memory_space<vmem>>, vector<150x128xbf16>
    %cst_7 = arith.constant dense<0.000000e+00> : vector<16x128xf32>
    %5 = tpu.matmul %3, %4, %cst_7 {dimension_numbers = #tpu.dot_dimension_numbers<[1], [0], [0], [1], [0, 0, 1, 1], [], []>} : vector<16x150xbf16>, vector<150x128xbf16>, vector<16x128xf32> -> vector<16x128xf32>
    %6 = arith.maximumf %2, %5 : vector<16x128xf32>
    %c0_8 = arith.constant 0 : index
    %c0_9 = arith.constant 0 : index
    %7 = vector.load %arg1[%c0_8, %c0_9] : memref<16x150xbf16, #tpu.memory_space<vmem>>, vector<16x150xbf16>
    %c0_10 = arith.constant 0 : index
    %c0_11 = arith.constant 0 : index
    %8 = vector.load %arg5[%c0_10, %c0_11] : memref<150x128xbf16, #tpu.memory_space<vmem>>, vector<150x128xbf16>
    %cst_12 = arith.constant dense<0.000000e+00> : vector<16x128xf32>
    %9 = tpu.matmul %7, %8, %cst_12 {dimension_numbers = #tpu.dot_dimension_numbers<[1], [0], [0], [1], [0, 0, 1, 1], [], []>} : vector<16x150xbf16>, vector<150x128xbf16>, vector<16x128xf32> -> vector<16x128xf32>
    %c0_13 = arith.constant 0 : index
    %c0_14 = arith.constant 0 : index
    %10 = vector.load %arg1[%c0_13, %c0_14] : memref<16x150xbf16, #tpu.memory_space<vmem>>, vector<16x150xbf16>
    %c0_15 = arith.constant 0 : index
    %c0_16 = arith.constant 0 : index
    %11 = vector.load %arg6[%c0_15, %c0_16] : memref<150x128xbf16, #tpu.memory_space<vmem>>, vector<150x128xbf16>
    %cst_17 = arith.constant dense<0.000000e+00> : vector<16x128xf32>
    %12 = tpu.matmul %10, %11, %cst_17 {dimension_numbers = #tpu.dot_dimension_numbers<[1], [0], [0], [1], [0, 0, 1, 1], [], []>} : vector<16x150xbf16>, vector<150x128xbf16>, vector<16x128xf32> -> vector<16x128xf32>
    %13 = arith.maximumf %9, %12 : vector<16x128xf32>
    %14 = arith.maximumf %6, %13 : vector<16x128xf32>
    %c0_18 = arith.constant 0 : index
    %c0_19 = arith.constant 0 : index
    %15 = vector.load %arg2[%c0_18, %c0_19] : memref<16x1xf32, #tpu.memory_space<vmem>>, vector<16x1xf32>
    %16 = vector.broadcast %15 : vector<16x1xf32> to vector<16x128xf32>
    %17 = arith.addf %14, %16 : vector<16x128xf32>
    %cst_20 = arith.constant 0.000000e+00 : f32
    %18 = vector.broadcast %cst_20 : f32 to vector<16x128xf32>
    %19 = arith.maximumf %17, %18 : vector<16x128xf32>
    %20 = arith.truncf %19 : vector<16x128xf32> to vector<16x128xbf16>
    %c0_21 = arith.constant 0 : index
    %c0_22 = arith.constant 0 : index
    %21 = vector.load %arg7[%c0_21, %c0_22] : memref<16x128xbf16, #tpu.memory_space<vmem>>, vector<16x128xbf16>
    tpu.vector_store %arg7[%c0_21, %c0_22], %20 {strides = array<i32>} : memref<16x128xbf16, #tpu.memory_space<vmem>>, vector<16x128xbf16>,
    return
  }
  func.func @transform_0(%arg0: i32) -> (i32, i32) {
    %c0_i32 = arith.constant 0 : i32
    %c0_i32_0 = arith.constant 0 : i32
    %c0_i32_1 = arith.constant 0 : i32
    return %c0_i32, %c0_i32_0 : i32, i32
  }
  func.func @transform_1(%arg0: i32) -> (i32, i32) {
    %c0_i32 = arith.constant 0 : i32
    %c0_i32_0 = arith.constant 0 : i32
    %c0_i32_1 = arith.constant 0 : i32
    return %c0_i32, %c0_i32_0 : i32, i32
  }
  func.func @transform_2(%arg0: i32) -> (i32, i32) {
    %c0_i32 = arith.constant 0 : i32
    %c0_i32_0 = arith.constant 0 : i32
    return %c0_i32, %arg0 : i32, i32
  }
  func.func @transform_3(%arg0: i32) -> (i32, i32) {
    %c0_i32 = arith.constant 0 : i32
    %c0_i32_0 = arith.constant 0 : i32
    return %c0_i32, %arg0 : i32, i32
  }
  func.func @transform_4(%arg0: i32) -> (i32, i32) {
    %c0_i32 = arith.constant 0 : i32
    %c0_i32_0 = arith.constant 0 : i32
    return %c0_i32, %arg0 : i32, i32
  }
  func.func @transform_5(%arg0: i32) -> (i32, i32) {
    %c0_i32 = arith.constant 0 : i32
    %c0_i32_0 = arith.constant 0 : i32
    return %c0_i32, %arg0 : i32, i32
  }
  func.func @transform_6(%arg0: i32) -> (i32, i32) {
    %c0_i32 = arith.constant 0 : i32
    %c0_i32_0 = arith.constant 0 : i32
    return %c0_i32, %arg0 : i32, i32
  }
}

module attributes {stable_mosaic.version = 11 : i64} {
  func.func @_fc_stack_kernel(%arg0: i32, %arg1: memref<256x128xbf16, #tpu.memory_space<vmem>>, %arg2: memref<120x256xbf16, #tpu.memory_space<vmem>>, %arg3: memref<120x1xf32, #tpu.memory_space<vmem>>, %arg4: memref<84x120xbf16, #tpu.memory_space<vmem>>, %arg5: memref<84x1xf32, #tpu.memory_space<vmem>>, %arg6: memref<10x84xbf16, #tpu.memory_space<vmem>>, %arg7: memref<10x1xf32, #tpu.memory_space<vmem>>, %arg8: memref<10x128xf32, #tpu.memory_space<vmem>>) attributes {dimension_semantics = [#tpu.dimension_semantics<parallel>], iteration_bounds = array<i64: 1>, scalar_prefetch = 0 : i64, scratch_operands = 0 : i64, tpu.core_type = #tpu.core_type<tc>, window_params = [{transform_indices = @transform_0, window_bounds = array<i64: 256, 128>}, {pipeline_mode = #tpu.pipeline_mode<synchronous>, transform_indices = @transform_1, window_bounds = array<i64: 120, 256>}, {pipeline_mode = #tpu.pipeline_mode<synchronous>, transform_indices = @transform_2, window_bounds = array<i64: 120, 1>}, {pipeline_mode = #tpu.pipeline_mode<synchronous>, transform_indices = @transform_3, window_bounds = array<i64: 84, 120>}, {pipeline_mode = #tpu.pipeline_mode<synchronous>, transform_indices = @transform_4, window_bounds = array<i64: 84, 1>}, {pipeline_mode = #tpu.pipeline_mode<synchronous>, transform_indices = @transform_5, window_bounds = array<i64: 10, 84>}, {pipeline_mode = #tpu.pipeline_mode<synchronous>, transform_indices = @transform_6, window_bounds = array<i64: 10, 1>}, {transform_indices = @transform_7, window_bounds = array<i64: 10, 128>}]} {
    %c0 = arith.constant 0 : index
    %c0_0 = arith.constant 0 : index
    %0 = vector.load %arg2[%c0, %c0_0] : memref<120x256xbf16, #tpu.memory_space<vmem>>, vector<120x256xbf16>
    %c0_1 = arith.constant 0 : index
    %c0_2 = arith.constant 0 : index
    %1 = vector.load %arg1[%c0_1, %c0_2] : memref<256x128xbf16, #tpu.memory_space<vmem>>, vector<256x128xbf16>
    %cst = arith.constant dense<0.000000e+00> : vector<120x128xf32>
    %2 = tpu.matmul %0, %1, %cst {dimension_numbers = #tpu.dot_dimension_numbers<[1], [0], [0], [1], [0, 0, 1, 1], [], []>} : vector<120x256xbf16>, vector<256x128xbf16>, vector<120x128xf32> -> vector<120x128xf32>
    %c0_3 = arith.constant 0 : index
    %c0_4 = arith.constant 0 : index
    %3 = vector.load %arg3[%c0_3, %c0_4] : memref<120x1xf32, #tpu.memory_space<vmem>>, vector<120x1xf32>
    %4 = vector.broadcast %3 : vector<120x1xf32> to vector<120x128xf32>
    %5 = arith.addf %2, %4 : vector<120x128xf32>
    %cst_5 = arith.constant 0.000000e+00 : f32
    %6 = vector.broadcast %cst_5 : f32 to vector<120x128xf32>
    %7 = arith.maximumf %5, %6 : vector<120x128xf32>
    %c0_6 = arith.constant 0 : index
    %c0_7 = arith.constant 0 : index
    %8 = vector.load %arg4[%c0_6, %c0_7] : memref<84x120xbf16, #tpu.memory_space<vmem>>, vector<84x120xbf16>
    %9 = arith.truncf %7 : vector<120x128xf32> to vector<120x128xbf16>
    %cst_8 = arith.constant dense<0.000000e+00> : vector<84x128xf32>
    %10 = tpu.matmul %8, %9, %cst_8 {dimension_numbers = #tpu.dot_dimension_numbers<[1], [0], [0], [1], [0, 0, 1, 1], [], []>} : vector<84x120xbf16>, vector<120x128xbf16>, vector<84x128xf32> -> vector<84x128xf32>
    %c0_9 = arith.constant 0 : index
    %c0_10 = arith.constant 0 : index
    %11 = vector.load %arg5[%c0_9, %c0_10] : memref<84x1xf32, #tpu.memory_space<vmem>>, vector<84x1xf32>
    %12 = vector.broadcast %11 : vector<84x1xf32> to vector<84x128xf32>
    %13 = arith.addf %10, %12 : vector<84x128xf32>
    %cst_11 = arith.constant 0.000000e+00 : f32
    %14 = vector.broadcast %cst_11 : f32 to vector<84x128xf32>
    %15 = arith.maximumf %13, %14 : vector<84x128xf32>
    %c0_12 = arith.constant 0 : index
    %c0_13 = arith.constant 0 : index
    %16 = vector.load %arg6[%c0_12, %c0_13] : memref<10x84xbf16, #tpu.memory_space<vmem>>, vector<10x84xbf16>
    %17 = arith.truncf %15 : vector<84x128xf32> to vector<84x128xbf16>
    %cst_14 = arith.constant dense<0.000000e+00> : vector<10x128xf32>
    %18 = tpu.matmul %16, %17, %cst_14 {dimension_numbers = #tpu.dot_dimension_numbers<[1], [0], [0], [1], [0, 0, 1, 1], [], []>} : vector<10x84xbf16>, vector<84x128xbf16>, vector<10x128xf32> -> vector<10x128xf32>
    %c0_15 = arith.constant 0 : index
    %c0_16 = arith.constant 0 : index
    %19 = vector.load %arg7[%c0_15, %c0_16] : memref<10x1xf32, #tpu.memory_space<vmem>>, vector<10x1xf32>
    %20 = vector.broadcast %19 : vector<10x1xf32> to vector<10x128xf32>
    %21 = arith.addf %18, %20 : vector<10x128xf32>
    %c0_17 = arith.constant 0 : index
    %c0_18 = arith.constant 0 : index
    %22 = vector.load %arg8[%c0_17, %c0_18] : memref<10x128xf32, #tpu.memory_space<vmem>>, vector<10x128xf32>
    tpu.vector_store %arg8[%c0_17, %c0_18], %21 {strides = array<i32>} : memref<10x128xf32, #tpu.memory_space<vmem>>, vector<10x128xf32>,
    return
  }
  func.func @transform_0(%arg0: i32) -> (i32, i32) {
    %c0_i32 = arith.constant 0 : i32
    %c0_i32_0 = arith.constant 0 : i32
    return %c0_i32, %arg0 : i32, i32
  }
  func.func @transform_1(%arg0: i32) -> (i32, i32) {
    %c0_i32 = arith.constant 0 : i32
    %c0_i32_0 = arith.constant 0 : i32
    %c0_i32_1 = arith.constant 0 : i32
    return %c0_i32, %c0_i32_0 : i32, i32
  }
  func.func @transform_2(%arg0: i32) -> (i32, i32) {
    %c0_i32 = arith.constant 0 : i32
    %c0_i32_0 = arith.constant 0 : i32
    %c0_i32_1 = arith.constant 0 : i32
    return %c0_i32, %c0_i32_0 : i32, i32
  }
  func.func @transform_3(%arg0: i32) -> (i32, i32) {
    %c0_i32 = arith.constant 0 : i32
    %c0_i32_0 = arith.constant 0 : i32
    %c0_i32_1 = arith.constant 0 : i32
    return %c0_i32, %c0_i32_0 : i32, i32
  }
  func.func @transform_4(%arg0: i32) -> (i32, i32) {
    %c0_i32 = arith.constant 0 : i32
    %c0_i32_0 = arith.constant 0 : i32
    %c0_i32_1 = arith.constant 0 : i32
    return %c0_i32, %c0_i32_0 : i32, i32
  }
  func.func @transform_5(%arg0: i32) -> (i32, i32) {
    %c0_i32 = arith.constant 0 : i32
    %c0_i32_0 = arith.constant 0 : i32
    %c0_i32_1 = arith.constant 0 : i32
    return %c0_i32, %c0_i32_0 : i32, i32
  }
  func.func @transform_6(%arg0: i32) -> (i32, i32) {
    %c0_i32 = arith.constant 0 : i32
    %c0_i32_0 = arith.constant 0 : i32
    %c0_i32_1 = arith.constant 0 : i32
    return %c0_i32, %c0_i32_0 : i32, i32
  }
  func.func @transform_7(%arg0: i32) -> (i32, i32) {
    %c0_i32 = arith.constant 0 : i32
    %c0_i32_0 = arith.constant 0 : i32
    return %c0_i32, %arg0 : i32, i32
  }
}

</mosaic_0001>

<llo_original>
// kernel: net_forward.3
$region0: #{net_forward.3}
  #allocation0 [shape = 'u32[]', space=smem, size = 0x4, offset = 0x4, fixed_abs, tag = 'smem constant byte address 0x4 - core index']
  #allocation1 [shape = 'u32[144,128]{1,0:T(1,128)}', space=vmem, size = 0x12000, scoped, tag = 'internal scratch']
  %s0 = inlined_call_operand.vmem [shape: bf16[6,25], index: 0, kind: input, shape index: {}]
  %s1 = inlined_call_operand.vmem [shape: f32[6,1], index: 1, kind: input, shape index: {}]
  %s2 = inlined_call_operand.vmem [shape: bf16[25,384], index: 2, kind: input, shape index: {}]
  %s3 = inlined_call_operand.vmem [shape: bf16[25,384], index: 3, kind: input, shape index: {}]
  %s4 = inlined_call_operand.vmem [shape: bf16[25,384], index: 4, kind: input, shape index: {}]
  %s5 = inlined_call_operand.vmem [shape: bf16[25,384], index: 5, kind: input, shape index: {}]
  %s6 = inlined_call_operand.vmem [shape: bf16[6,384], index: 6, kind: output, shape index: {}]
  %s7 = sld [smem:[#allocation0]]
  $region221: #{net_forward.3} parent=0
    _
  %s9 = ssub.s32 1, %s7
  %s10 = scalar_select 0, %s9, %s7
  $region1: #{net_forward.3} parent=0
    #allocation2 [shape = 'u8[16384]{0}', space=vmem, size = 0x4000, scoped, tag = 'input window, operand 2']
    #allocation3 [shape = 'u8[16384]{0}', space=vmem, size = 0x4000, scoped, tag = 'input window, operand 3']
    #allocation4 [shape = 'u8[16384]{0}', space=vmem, size = 0x4000, scoped, tag = 'input window, operand 4']
    #allocation5 [shape = 'u8[16384]{0}', space=vmem, size = 0x4000, scoped, tag = 'input window, operand 5']
    loop: start=0, step=1, limit=5
    $region2: #{net_forward.3} parent=1 // loop_pre_header
      _
    $region3: #{net_forward.3} parent=1 // loop_header
      %s12 = sphi 0, %s16
      %p13 = scmp.ge.s32.totalorder %s12, 5
      %s20 = sphi 0, %s20
      %s22 = sphi 0, %s20
      %s23 = sphi 0, %s22
      %s37 = sphi 0, %s23
      %s41 = sphi 0, %s41
      %s43 = sphi 0, %s41
      %s44 = sphi 0, %s43
      %s58 = sphi 0, %s44
      %s64 = sphi 0, %s66
      %s67 = sphi 0, %s64
      %s68 = sphi 0, %s67
      %s84 = sphi 0, %s68
      %s90 = sphi 0, %s92
      %s93 = sphi 0, %s90
      %s94 = sphi 0, %s93
      %s110 = sphi 0, %s94
      %s116 = sphi 0, %s118
      %s119 = sphi 0, %s116
      %s120 = sphi 0, %s119
      %s136 = sphi 0, %s120
      %s142 = sphi 0, %s144
      %s145 = sphi 0, %s142
      %s146 = sphi 0, %s145
      %s162 = sphi 0, %s146
      %s168 = sphi 0, %s170
      %s171 = sphi 0, %s168
      %s172 = sphi 0, %s171
      %s188 = sphi 0, %s172
    $region4: #{net_forward.3} parent=1 // loop_header_branch
      %15 = sbr.rel (%p13) target = $region8
    $region5: #{net_forward.3} parent=1 // loop_body
      %s17 = ssub.s32 %s12, 1
      %s18 = ssub.s32 %s12, 2
      %s19 = sadd.s32 %s12, 1
      %s21 = sadd.s32 %s20, 1
      %p24 = scmp.eq.s32.totalorder %s12, 2
      %p25 = scmp.ne.s32.totalorder %s20, %s22
      %p26 = scmp.eq.s32.totalorder %s12, 0
      %p27 = por %p25, %p26
      %p28 = scmp.ne.s32.totalorder %s20, %s22
      %p29 = scmp.eq.s32.totalorder %s17, 2
      %p30 = por %p28, %p29
      %p31 = scmp.ne.s32.totalorder %s22, %s23
      %p32 = scmp.eq.s32.totalorder %s17, 0
      %p33 = por %p31, %p32
      %p34 = scmp.ne.s32.totalorder %s22, %s23
      %p35 = scmp.eq.s32.totalorder %s18, 2
      %p36 = por %p34, %p35
      %p38 = scmp.ne.s32.totalorder %s23, %s37
      %p39 = scmp.eq.s32.totalorder %s18, 0
      %p40 = por %p38, %p39
      %s42 = sadd.s32 %s41, 1
      %p45 = scmp.eq.s32.totalorder %s12, 2
      %p46 = scmp.ne.s32.totalorder %s41, %s43
      %p47 = scmp.eq.s32.totalorder %s12, 0
      %p48 = por %p46, %p47
      %p49 = scmp.ne.s32.totalorder %s41, %s43
      %p50 = scmp.eq.s32.totalorder %s17, 2
      %p51 = por %p49, %p50
      %p52 = scmp.ne.s32.totalorder %s43, %s44
      %p53 = scmp.eq.s32.totalorder %s17, 0
      %p54 = por %p52, %p53
      %p55 = scmp.ne.s32.totalorder %s43, %s44
      %p56 = scmp.eq.s32.totalorder %s18, 2
      %p57 = por %p55, %p56
      %p59 = scmp.ne.s32.totalorder %s44, %s58
      %p60 = scmp.eq.s32.totalorder %s18, 0
      %p61 = por %p59, %p60
      %s62 = ssub.s32 %s12, %s19
      %p63 = scmp.eq.s32.totalorder %s62, 0
      %s65 = sadd.s32 %s64, 1
      %s66 = scalar_select %p63, %s64, %s65
      %p69 = pneg %p63
      %p70 = scmp.eq.s32.totalorder %s12, 2
      %p71 = por %p69, %p70
      %p72 = scmp.ne.s32.totalorder %s64, %s67
      %p73 = scmp.eq.s32.totalorder %s12, 0
      %p74 = por %p72, %p73
      %p75 = scmp.ne.s32.totalorder %s64, %s67
      %p76 = scmp.eq.s32.totalorder %s17, 2
      %p77 = por %p75, %p76
      %p78 = scmp.ne.s32.totalorder %s67, %s68
      %p79 = scmp.eq.s32.totalorder %s17, 0
      %p80 = por %p78, %p79
      %p81 = scmp.ne.s32.totalorder %s67, %s68
      %p82 = scmp.eq.s32.totalorder %s18, 2
      %p83 = por %p81, %p82
      %p85 = scmp.ne.s32.totalorder %s68, %s84
      %p86 = scmp.eq.s32.totalorder %s18, 0
      %p87 = por %p85, %p86
      %s88 = ssub.s32 %s12, %s19
      %p89 = scmp.eq.s32.totalorder %s88, 0
      %s91 = sadd.s32 %s90, 1
      %s92 = scalar_select %p89, %s90, %s91
      %p95 = pneg %p89
      %p96 = scmp.eq.s32.totalorder %s12, 2
      %p97 = por %p95, %p96
      %p98 = scmp.ne.s32.totalorder %s90, %s93
      %p99 = scmp.eq.s32.totalorder %s12, 0
      %p100 = por %p98, %p99
      %p101 = scmp.ne.s32.totalorder %s90, %s93
      %p102 = scmp.eq.s32.totalorder %s17, 2
      %p103 = por %p101, %p102
      %p104 = scmp.ne.s32.totalorder %s93, %s94
      %p105 = scmp.eq.s32.totalorder %s17, 0
      %p106 = por %p104, %p105
      %p107 = scmp.ne.s32.totalorder %s93, %s94
      %p108 = scmp.eq.s32.totalorder %s18, 2
      %p109 = por %p107, %p108
      %p111 = scmp.ne.s32.totalorder %s94, %s110
      %p112 = scmp.eq.s32.totalorder %s18, 0
      %p113 = por %p111, %p112
      %s114 = ssub.s32 %s12, %s19
      %p115 = scmp.eq.s32.totalorder %s114, 0
      %s117 = sadd.s32 %s116, 1
      %s118 = scalar_select %p115, %s116, %s117
      %p121 = pneg %p115
      %p122 = scmp.eq.s32.totalorder %s12, 2
      %p123 = por %p121, %p122
      %p124 = scmp.ne.s32.totalorder %s116, %s119
      %p125 = scmp.eq.s32.totalorder %s12, 0
      %p126 = por %p124, %p125
      %p127 = scmp.ne.s32.totalorder %s116, %s119
      %p128 = scmp.eq.s32.totalorder %s17, 2
      %p129 = por %p127, %p128
      %p130 = scmp.ne.s32.totalorder %s119, %s120
      %p131 = scmp.eq.s32.totalorder %s17, 0
      %p132 = por %p130, %p131
      %p133 = scmp.ne.s32.totalorder %s119, %s120
      %p134 = scmp.eq.s32.totalorder %s18, 2
      %p135 = por %p133, %p134
      %p137 = scmp.ne.s32.totalorder %s120, %s136
      %p138 = scmp.eq.s32.totalorder %s18, 0
      %p139 = por %p137, %p138
      %s140 = ssub.s32 %s12, %s19
      %p141 = scmp.eq.s32.totalorder %s140, 0
      %s143 = sadd.s32 %s142, 1
      %s144 = scalar_select %p141, %s142, %s143
      %p147 = pneg %p141
      %p148 = scmp.eq.s32.totalorder %s12, 2
      %p149 = por %p147, %p148
      %p150 = scmp.ne.s32.totalorder %s142, %s145
      %p151 = scmp.eq.s32.totalorder %s12, 0
      %p152 = por %p150, %p151
      %p153 = scmp.ne.s32.totalorder %s142, %s145
      %p154 = scmp.eq.s32.totalorder %s17, 2
      %p155 = por %p153, %p154
      %p156 = scmp.ne.s32.totalorder %s145, %s146
      %p157 = scmp.eq.s32.totalorder %s17, 0
      %p158 = por %p156, %p157
      %p159 = scmp.ne.s32.totalorder %s145, %s146
      %p160 = scmp.eq.s32.totalorder %s18, 2
      %p161 = por %p159, %p160
      %p163 = scmp.ne.s32.totalorder %s146, %s162
      %p164 = scmp.eq.s32.totalorder %s18, 0
      %p165 = por %p163, %p164
      %s166 = ssub.s32 %s12, %s19
      %p167 = scmp.eq.s32.totalorder %s166, 0
      %s169 = sadd.s32 %s168, 1
      %s170 = scalar_select %p167, %s168, %s169
      %p173 = pneg %p167
      %p174 = scmp.eq.s32.totalorder %s12, 2
      %p175 = por %p173, %p174
      %p176 = scmp.ne.s32.totalorder %s168, %s171
      %p177 = scmp.eq.s32.totalorder %s12, 0
      %p178 = por %p176, %p177
      %p179 = scmp.ne.s32.totalorder %s168, %s171
      %p180 = scmp.eq.s32.totalorder %s17, 2
      %p181 = por %p179, %p180
      %p182 = scmp.ne.s32.totalorder %s171, %s172
      %p183 = scmp.eq.s32.totalorder %s17, 0
      %p184 = por %p182, %p183
      %p185 = scmp.ne.s32.totalorder %s171, %s172
      %p186 = scmp.eq.s32.totalorder %s18, 2
      %p187 = por %p185, %p186
      %p189 = scmp.ne.s32.totalorder %s172, %s188
      %p190 = scmp.eq.s32.totalorder %s18, 0
      %p191 = por %p189, %p190
      %p192 = scmp.le.s32.totalorder 1, %s12
      %p193 = scmp.lt.s32.totalorder %s12, 4
      %p194 = pnand %p192, %p193
      %p195 = pneg %p194
      // Predicated region
      $region9: #{net_forward.3} parent=5 // pred_check
        _
      $region10: #{net_forward.3} parent=5 // pred_check_branch
        %197 = sbr.rel (%p194) target = $region12
      $region11: #{net_forward.3} parent=5 // pred_region
        %s198 = ssub.s32 %s12, 1
        // Predicated region
        $region13: #{net_forward.3} parent=11 // pred_check
          %p199 = pneg %p33
        $region14: #{net_forward.3} parent=11 // pred_check_branch
          %201 = sbr.rel (%p199) target = $region16
        $region15: #{net_forward.3} parent=11 // pred_region
          _
        $region16: #{net_forward.3} parent=11 // pred_fallthru
          _
        // Predicated region
        $region17: #{net_forward.3} parent=11 // pred_check
          %p202 = pneg %p54
        $region18: #{net_forward.3} parent=11 // pred_check_branch
          %204 = sbr.rel (%p202) target = $region20
        $region19: #{net_forward.3} parent=11 // pred_region
          _
        $region20: #{net_forward.3} parent=11 // pred_fallthru
          _
      $region12: #{net_forward.3} parent=5 // pred_fallthru
        _
      %p205 = scmp.lt.s32.totalorder %s12, 3
      // Predicated region
      $region21: #{net_forward.3} parent=5 // pred_check
        %p206 = pneg %p205
      $region22: #{net_forward.3} parent=5 // pred_check_branch
        %208 = sbr.rel (%p206) target = $region24
      $region23: #{net_forward.3} parent=5 // pred_region
        // Predicated region
        $region25: #{net_forward.3} parent=23 // pred_check
          %p209 = pneg %p74
        $region26: #{net_forward.3} parent=23 // pred_check_branch
          %211 = sbr.rel (%p209) target = $region28
        $region27: #{net_forward.3} parent=23 // pred_region
          %s212 = sand.u32 %s64, 1
          %s213 = sand.u32 %s64, 1
          %s214 = smul.addr %s213, 16
          %s215 = scalar_lea.vmem [#allocation2], %s214
          %s216 = smul.addr %s12, 4
          %s217 = scalar_lea.vmem %s2, %s216
          // Predicated region
          $region29: #{net_forward.3} parent=27 // pred_check
            _
          $region30: #{net_forward.3} parent=27 // pred_check_branch
            %219 = sbr.rel (0) target = $region32
          $region31: #{net_forward.3} parent=27 // pred_region
            // Predicated region
            $region33: #{net_forward.3} parent=31 // pred_check
              _
            $region34: #{net_forward.3} parent=31 // pred_check_branch
              %221 = sbr.rel target = $region36
            $region35: #{net_forward.3} parent=31 // pred_region
              // Predicated region
              $region48: #{net_forward.3} parent=35 // pred_check
                _
              $region49: #{net_forward.3} parent=35 // pred_check_branch
                %242 = sbr.rel (0) target = $region51
              $region50: #{net_forward.3} parent=35 // pred_region
                loop: start=0, step=1, limit=1
                $region52: #{net_forward.3} parent=50 // loop_pre_header
                  _
                $region53: #{net_forward.3} parent=50 // loop_header
                  %s244 = sphi 0, %s248
                  %p245 = scmp.ge.s32.totalorder %s244, 1
                  %s249 = sphi %s217, %s217
                  %s250 = sphi %s215, %s215
                $region54: #{net_forward.3} parent=50 // loop_header_branch
                  %247 = sbr.rel (%p245) target = $region58
                $region55: #{net_forward.3} parent=50 // loop_body
                  _
                $region56: #{net_forward.3} parent=50 // loop_footer
                  %s248 = sadd.s32 1, %s244
                $region57: #{net_forward.3} parent=50 // loop_footer_branch
                  %243 = sbr.rel target = $region53
                $region58: #{net_forward.3} parent=50 // loop_exit
                  _
                loop: start=0, step=1, limit=1
                $region59: #{net_forward.3} parent=50 // loop_pre_header
                  _
                $region60: #{net_forward.3} parent=50 // loop_header
                  %s253 = sphi 0, %s257
                  %p254 = scmp.ge.s32.totalorder %s253, 1
                  %s258 = sphi %s217, %s217
                  %s259 = sphi %s215, %s215
                $region61: #{net_forward.3} parent=50 // loop_header_branch
                  %256 = sbr.rel (%p254) target = $region65
                $region62: #{net_forward.3} parent=50 // loop_body
                  %v260 = vld [vmem:[%s258] sm:$0xf]
                  %261 = vst [vmem:[%s259] sm:$0xf] %v260
                  %v262 = vld [vmem:[%s258 + $0xc] sm:$0xf]
                  %263 = vst [vmem:[%s259 + $0x4] sm:$0xf] %v262
                  %v264 = vld [vmem:[%s258 + $0x18] sm:$0xf]
                  %265 = vst [vmem:[%s259 + $0x8] sm:$0xf] %v264
                  %v266 = vld [vmem:[%s258 + $0x24] sm:$0xf]
                  %267 = vst [vmem:[%s259 + $0xc] sm:$0xf] %v266
                $region63: #{net_forward.3} parent=50 // loop_footer
                  %s257 = sadd.s32 1, %s253
                $region64: #{net_forward.3} parent=50 // loop_footer_branch
                  %252 = sbr.rel target = $region60
                $region65: #{net_forward.3} parent=50 // loop_exit
                  _
              $region51: #{net_forward.3} parent=35 // pred_fallthru
                _
            $region36: #{net_forward.3} parent=31 // pred_fallthru
              _
            // Predicated region
            $region37: #{net_forward.3} parent=31 // pred_check
              _
            $region38: #{net_forward.3} parent=31 // pred_check_branch
              %223 = sbr.rel (0) target = $region40
            $region39: #{net_forward.3} parent=31 // pred_region
              loop: start=0, step=1, limit=1
              $region41: #{net_forward.3} parent=39 // loop_pre_header
                _
              $region42: #{net_forward.3} parent=39 // loop_header
                %s226 = sphi 0, %s230
                %p227 = scmp.ge.s32.totalorder %s226, 1
                %s231 = sphi %s217, %s217
                %s232 = sphi %s215, %s215
              $region43: #{net_forward.3} parent=39 // loop_header_branch
                %229 = sbr.rel (%p227) target = $region47
              $region44: #{net_forward.3} parent=39 // loop_body
                %v233 = vld [vmem:[%s231] sm:$0xf]
                %234 = vst [vmem:[%s232] sm:$0xf] %v233
                %v235 = vld [vmem:[%s231 + $0xc] sm:$0xf]
                %236 = vst [vmem:[%s232 + $0x4] sm:$0xf] %v235
                %v237 = vld [vmem:[%s231 + $0x18] sm:$0xf]
                %238 = vst [vmem:[%s232 + $0x8] sm:$0xf] %v237
                %v239 = vld [vmem:[%s231 + $0x24] sm:$0xf]
                %240 = vst [vmem:[%s232 + $0xc] sm:$0xf] %v239
              $region45: #{net_forward.3} parent=39 // loop_footer
                %s230 = sadd.s32 1, %s226
              $region46: #{net_forward.3} parent=39 // loop_footer_branch
                %225 = sbr.rel target = $region42
              $region47: #{net_forward.3} parent=39 // loop_exit
                _
            $region40: #{net_forward.3} parent=31 // pred_fallthru
              _
          $region32: #{net_forward.3} parent=27 // pred_fallthru
            _
          %268 = vnop
        $region28: #{net_forward.3} parent=23 // pred_fallthru
          _
        // Predicated region
        $region66: #{net_forward.3} parent=23 // pred_check
          %p269 = pneg %p100
        $region67: #{net_forward.3} parent=23 // pred_check_branch
          %271 = sbr.rel (%p269) target = $region69
        $region68: #{net_forward.3} parent=23 // pred_region
          %s272 = sand.u32 %s90, 1
          %s273 = sand.u32 %s90, 1
          %s274 = smul.addr %s273, 16
          %s275 = scalar_lea.vmem [#allocation3], %s274
          %s276 = smul.addr %s12, 4
          %s277 = scalar_lea.vmem %s3, %s276
          // Predicated region
          $region70: #{net_forward.3} parent=68 // pred_check
            _
          $region71: #{net_forward.3} parent=68 // pred_check_branch
            %279 = sbr.rel (0) target = $region73
          $region72: #{net_forward.3} parent=68 // pred_region
            // Predicated region
            $region74: #{net_forward.3} parent=72 // pred_check
              _
            $region75: #{net_forward.3} parent=72 // pred_check_branch
              %281 = sbr.rel target = $region77
            $region76: #{net_forward.3} parent=72 // pred_region
              // Predicated region
              $region89: #{net_forward.3} parent=76 // pred_check
                _
              $region90: #{net_forward.3} parent=76 // pred_check_branch
                %302 = sbr.rel (0) target = $region92
              $region91: #{net_forward.3} parent=76 // pred_region
                loop: start=0, step=1, limit=1
                $region93: #{net_forward.3} parent=91 // loop_pre_header
                  _
                $region94: #{net_forward.3} parent=91 // loop_header
                  %s304 = sphi 0, %s308
                  %p305 = scmp.ge.s32.totalorder %s304, 1
                  %s309 = sphi %s277, %s277
                  %s310 = sphi %s275, %s275
                $region95: #{net_forward.3} parent=91 // loop_header_branch
                  %307 = sbr.rel (%p305) target = $region99
                $region96: #{net_forward.3} parent=91 // loop_body
                  _
                $region97: #{net_forward.3} parent=91 // loop_footer
                  %s308 = sadd.s32 1, %s304
                $region98: #{net_forward.3} parent=91 // loop_footer_branch
                  %303 = sbr.rel target = $region94
                $region99: #{net_forward.3} parent=91 // loop_exit
                  _
                loop: start=0, step=1, limit=1
                $region100: #{net_forward.3} parent=91 // loop_pre_header
                  _
                $region101: #{net_forward.3} parent=91 // loop_header
                  %s313 = sphi 0, %s317
                  %p314 = scmp.ge.s32.totalorder %s313, 1
                  %s318 = sphi %s277, %s277
                  %s319 = sphi %s275, %s275
                $region102: #{net_forward.3} parent=91 // loop_header_branch
                  %316 = sbr.rel (%p314) target = $region106
                $region103: #{net_forward.3} parent=91 // loop_body
                  %v320 = vld [vmem:[%s318] sm:$0xf]
                  %321 = vst [vmem:[%s319] sm:$0xf] %v320
                  %v322 = vld [vmem:[%s318 + $0xc] sm:$0xf]
                  %323 = vst [vmem:[%s319 + $0x4] sm:$0xf] %v322
                  %v324 = vld [vmem:[%s318 + $0x18] sm:$0xf]
                  %325 = vst [vmem:[%s319 + $0x8] sm:$0xf] %v324
                  %v326 = vld [vmem:[%s318 + $0x24] sm:$0xf]
                  %327 = vst [vmem:[%s319 + $0xc] sm:$0xf] %v326
                $region104: #{net_forward.3} parent=91 // loop_footer
                  %s317 = sadd.s32 1, %s313
                $region105: #{net_forward.3} parent=91 // loop_footer_branch
                  %312 = sbr.rel target = $region101
                $region106: #{net_forward.3} parent=91 // loop_exit
                  _
              $region92: #{net_forward.3} parent=76 // pred_fallthru
                _
            $region77: #{net_forward.3} parent=72 // pred_fallthru
              _
            // Predicated region
            $region78: #{net_forward.3} parent=72 // pred_check
              _
            $region79: #{net_forward.3} parent=72 // pred_check_branch
              %283 = sbr.rel (0) target = $region81
            $region80: #{net_forward.3} parent=72 // pred_region
              loop: start=0, step=1, limit=1
              $region82: #{net_forward.3} parent=80 // loop_pre_header
                _
              $region83: #{net_forward.3} parent=80 // loop_header
                %s286 = sphi 0, %s290
                %p287 = scmp.ge.s32.totalorder %s286, 1
                %s291 = sphi %s277, %s277
                %s292 = sphi %s275, %s275
              $region84: #{net_forward.3} parent=80 // loop_header_branch
                %289 = sbr.rel (%p287) target = $region88
              $region85: #{net_forward.3} parent=80 // loop_body
                %v293 = vld [vmem:[%s291] sm:$0xf]
                %294 = vst [vmem:[%s292] sm:$0xf] %v293
                %v295 = vld [vmem:[%s291 + $0xc] sm:$0xf]
                %296 = vst [vmem:[%s292 + $0x4] sm:$0xf] %v295
                %v297 = vld [vmem:[%s291 + $0x18] sm:$0xf]
                %298 = vst [vmem:[%s292 + $0x8] sm:$0xf] %v297
                %v299 = vld [vmem:[%s291 + $0x24] sm:$0xf]
                %300 = vst [vmem:[%s292 + $0xc] sm:$0xf] %v299
              $region86: #{net_forward.3} parent=80 // loop_footer
                %s290 = sadd.s32 1, %s286
              $region87: #{net_forward.3} parent=80 // loop_footer_branch
                %285 = sbr.rel target = $region83
              $region88: #{net_forward.3} parent=80 // loop_exit
                _
            $region81: #{net_forward.3} parent=72 // pred_fallthru
              _
          $region73: #{net_forward.3} parent=68 // pred_fallthru
            _
          %328 = vnop
        $region69: #{net_forward.3} parent=23 // pred_fallthru
          _
        // Predicated region
        $region107: #{net_forward.3} parent=23 // pred_check
          %p329 = pneg %p126
        $region108: #{net_forward.3} parent=23 // pred_check_branch
          %331 = sbr.rel (%p329) target = $region110
        $region109: #{net_forward.3} parent=23 // pred_region
          %s332 = sand.u32 %s116, 1
          %s333 = sand.u32 %s116, 1
          %s334 = smul.addr %s333, 16
          %s335 = scalar_lea.vmem [#allocation4], %s334
          %s336 = smul.addr %s12, 4
          %s337 = scalar_lea.vmem %s4, %s336
          // Predicated region
          $region111: #{net_forward.3} parent=109 // pred_check
            _
          $region112: #{net_forward.3} parent=109 // pred_check_branch
            %339 = sbr.rel (0) target = $region114
          $region113: #{net_forward.3} parent=109 // pred_region
            // Predicated region
            $region115: #{net_forward.3} parent=113 // pred_check
              _
            $region116: #{net_forward.3} parent=113 // pred_check_branch
              %341 = sbr.rel target = $region118
            $region117: #{net_forward.3} parent=113 // pred_region
              // Predicated region
              $region130: #{net_forward.3} parent=117 // pred_check
                _
              $region131: #{net_forward.3} parent=117 // pred_check_branch
                %362 = sbr.rel (0) target = $region133
              $region132: #{net_forward.3} parent=117 // pred_region
                loop: start=0, step=1, limit=1
                $region134: #{net_forward.3} parent=132 // loop_pre_header
                  _
                $region135: #{net_forward.3} parent=132 // loop_header
                  %s364 = sphi 0, %s368
                  %p365 = scmp.ge.s32.totalorder %s364, 1
                  %s369 = sphi %s337, %s337
                  %s370 = sphi %s335, %s335
                $region136: #{net_forward.3} parent=132 // loop_header_branch
                  %367 = sbr.rel (%p365) target = $region140
                $region137: #{net_forward.3} parent=132 // loop_body
                  _
                $region138: #{net_forward.3} parent=132 // loop_footer
                  %s368 = sadd.s32 1, %s364
                $region139: #{net_forward.3} parent=132 // loop_footer_branch
                  %363 = sbr.rel target = $region135
                $region140: #{net_forward.3} parent=132 // loop_exit
                  _
                loop: start=0, step=1, limit=1
                $region141: #{net_forward.3} parent=132 // loop_pre_header
                  _
                $region142: #{net_forward.3} parent=132 // loop_header
                  %s373 = sphi 0, %s377
                  %p374 = scmp.ge.s32.totalorder %s373, 1
                  %s378 = sphi %s337, %s337
                  %s379 = sphi %s335, %s335
                $region143: #{net_forward.3} parent=132 // loop_header_branch
                  %376 = sbr.rel (%p374) target = $region147
                $region144: #{net_forward.3} parent=132 // loop_body
                  %v380 = vld [vmem:[%s378] sm:$0xf]
                  %381 = vst [vmem:[%s379] sm:$0xf] %v380
                  %v382 = vld [vmem:[%s378 + $0xc] sm:$0xf]
                  %383 = vst [vmem:[%s379 + $0x4] sm:$0xf] %v382
                  %v384 = vld [vmem:[%s378 + $0x18] sm:$0xf]
                  %385 = vst [vmem:[%s379 + $0x8] sm:$0xf] %v384
                  %v386 = vld [vmem:[%s378 + $0x24] sm:$0xf]
                  %387 = vst [vmem:[%s379 + $0xc] sm:$0xf] %v386
                $region145: #{net_forward.3} parent=132 // loop_footer
                  %s377 = sadd.s32 1, %s373
                $region146: #{net_forward.3} parent=132 // loop_footer_branch
                  %372 = sbr.rel target = $region142
                $region147: #{net_forward.3} parent=132 // loop_exit
                  _
              $region133: #{net_forward.3} parent=117 // pred_fallthru
                _
            $region118: #{net_forward.3} parent=113 // pred_fallthru
              _
            // Predicated region
            $region119: #{net_forward.3} parent=113 // pred_check
              _
            $region120: #{net_forward.3} parent=113 // pred_check_branch
              %343 = sbr.rel (0) target = $region122
            $region121: #{net_forward.3} parent=113 // pred_region
              loop: start=0, step=1, limit=1
              $region123: #{net_forward.3} parent=121 // loop_pre_header
                _
              $region124: #{net_forward.3} parent=121 // loop_header
                %s346 = sphi 0, %s350
                %p347 = scmp.ge.s32.totalorder %s346, 1
                %s351 = sphi %s337, %s337
                %s352 = sphi %s335, %s335
              $region125: #{net_forward.3} parent=121 // loop_header_branch
                %349 = sbr.rel (%p347) target = $region129
              $region126: #{net_forward.3} parent=121 // loop_body
                %v353 = vld [vmem:[%s351] sm:$0xf]
                %354 = vst [vmem:[%s352] sm:$0xf] %v353
                %v355 = vld [vmem:[%s351 + $0xc] sm:$0xf]
                %356 = vst [vmem:[%s352 + $0x4] sm:$0xf] %v355
                %v357 = vld [vmem:[%s351 + $0x18] sm:$0xf]
                %358 = vst [vmem:[%s352 + $0x8] sm:$0xf] %v357
                %v359 = vld [vmem:[%s351 + $0x24] sm:$0xf]
                %360 = vst [vmem:[%s352 + $0xc] sm:$0xf] %v359
              $region127: #{net_forward.3} parent=121 // loop_footer
                %s350 = sadd.s32 1, %s346
              $region128: #{net_forward.3} parent=121 // loop_footer_branch
                %345 = sbr.rel target = $region124
              $region129: #{net_forward.3} parent=121 // loop_exit
                _
            $region122: #{net_forward.3} parent=113 // pred_fallthru
              _
          $region114: #{net_forward.3} parent=109 // pred_fallthru
            _
          %388 = vnop
        $region110: #{net_forward.3} parent=23 // pred_fallthru
          _
        // Predicated region
        $region148: #{net_forward.3} parent=23 // pred_check
          %p389 = pneg %p152
        $region149: #{net_forward.3} parent=23 // pred_check_branch
          %391 = sbr.rel (%p389) target = $region151
        $region150: #{net_forward.3} parent=23 // pred_region
          %s392 = sand.u32 %s142, 1
          %s393 = sand.u32 %s142, 1
          %s394 = smul.addr %s393, 16
          %s395 = scalar_lea.vmem [#allocation5], %s394
          %s396 = smul.addr %s12, 4
          %s397 = scalar_lea.vmem %s5, %s396
          // Predicated region
          $region152: #{net_forward.3} parent=150 // pred_check
            _
          $region153: #{net_forward.3} parent=150 // pred_check_branch
            %399 = sbr.rel (0) target = $region155
          $region154: #{net_forward.3} parent=150 // pred_region
            // Predicated region
            $region156: #{net_forward.3} parent=154 // pred_check
              _
            $region157: #{net_forward.3} parent=154 // pred_check_branch
              %401 = sbr.rel target = $region159
            $region158: #{net_forward.3} parent=154 // pred_region
              // Predicated region
              $region171: #{net_forward.3} parent=158 // pred_check
                _
              $region172: #{net_forward.3} parent=158 // pred_check_branch
                %422 = sbr.rel (0) target = $region174
              $region173: #{net_forward.3} parent=158 // pred_region
                loop: start=0, step=1, limit=1
                $region175: #{net_forward.3} parent=173 // loop_pre_header
                  _
                $region176: #{net_forward.3} parent=173 // loop_header
                  %s424 = sphi 0, %s428
                  %p425 = scmp.ge.s32.totalorder %s424, 1
                  %s429 = sphi %s397, %s397
                  %s430 = sphi %s395, %s395
                $region177: #{net_forward.3} parent=173 // loop_header_branch
                  %427 = sbr.rel (%p425) target = $region181
                $region178: #{net_forward.3} parent=173 // loop_body
                  _
                $region179: #{net_forward.3} parent=173 // loop_footer
                  %s428 = sadd.s32 1, %s424
                $region180: #{net_forward.3} parent=173 // loop_footer_branch
                  %423 = sbr.rel target = $region176
                $region181: #{net_forward.3} parent=173 // loop_exit
                  _
                loop: start=0, step=1, limit=1
                $region182: #{net_forward.3} parent=173 // loop_pre_header
                  _
                $region183: #{net_forward.3} parent=173 // loop_header
                  %s433 = sphi 0, %s437
                  %p434 = scmp.ge.s32.totalorder %s433, 1
                  %s438 = sphi %s397, %s397
                  %s439 = sphi %s395, %s395
                $region184: #{net_forward.3} parent=173 // loop_header_branch
                  %436 = sbr.rel (%p434) target = $region188
                $region185: #{net_forward.3} parent=173 // loop_body
                  %v440 = vld [vmem:[%s438] sm:$0xf]
                  %441 = vst [vmem:[%s439] sm:$0xf] %v440
                  %v442 = vld [vmem:[%s438 + $0xc] sm:$0xf]
                  %443 = vst [vmem:[%s439 + $0x4] sm:$0xf] %v442
                  %v444 = vld [vmem:[%s438 + $0x18] sm:$0xf]
                  %445 = vst [vmem:[%s439 + $0x8] sm:$0xf] %v444
                  %v446 = vld [vmem:[%s438 + $0x24] sm:$0xf]
                  %447 = vst [vmem:[%s439 + $0xc] sm:$0xf] %v446
                $region186: #{net_forward.3} parent=173 // loop_footer
                  %s437 = sadd.s32 1, %s433
                $region187: #{net_forward.3} parent=173 // loop_footer_branch
                  %432 = sbr.rel target = $region183
                $region188: #{net_forward.3} parent=173 // loop_exit
                  _
              $region174: #{net_forward.3} parent=158 // pred_fallthru
                _
            $region159: #{net_forward.3} parent=154 // pred_fallthru
              _
            // Predicated region
            $region160: #{net_forward.3} parent=154 // pred_check
              _
            $region161: #{net_forward.3} parent=154 // pred_check_branch
              %403 = sbr.rel (0) target = $region163
            $region162: #{net_forward.3} parent=154 // pred_region
              loop: start=0, step=1, limit=1
              $region164: #{net_forward.3} parent=162 // loop_pre_header
                _
              $region165: #{net_forward.3} parent=162 // loop_header
                %s406 = sphi 0, %s410
                %p407 = scmp.ge.s32.totalorder %s406, 1
                %s411 = sphi %s397, %s397
                %s412 = sphi %s395, %s395
              $region166: #{net_forward.3} parent=162 // loop_header_branch
                %409 = sbr.rel (%p407) target = $region170
              $region167: #{net_forward.3} parent=162 // loop_body
                %v413 = vld [vmem:[%s411] sm:$0xf]
                %414 = vst [vmem:[%s412] sm:$0xf] %v413
                %v415 = vld [vmem:[%s411 + $0xc] sm:$0xf]
                %416 = vst [vmem:[%s412 + $0x4] sm:$0xf] %v415
                %v417 = vld [vmem:[%s411 + $0x18] sm:$0xf]
                %418 = vst [vmem:[%s412 + $0x8] sm:$0xf] %v417
                %v419 = vld [vmem:[%s411 + $0x24] sm:$0xf]
                %420 = vst [vmem:[%s412 + $0xc] sm:$0xf] %v419
              $region168: #{net_forward.3} parent=162 // loop_footer
                %s410 = sadd.s32 1, %s406
              $region169: #{net_forward.3} parent=162 // loop_footer_branch
                %405 = sbr.rel target = $region165
              $region170: #{net_forward.3} parent=162 // loop_exit
                _
            $region163: #{net_forward.3} parent=154 // pred_fallthru
              _
          $region155: #{net_forward.3} parent=150 // pred_fallthru
            _
          %448 = vnop
        $region151: #{net_forward.3} parent=23 // pred_fallthru
          _
      $region24: #{net_forward.3} parent=5 // pred_fallthru
        _
      %p449 = scmp.le.s32.totalorder 1, %s12
      %p450 = scmp.lt.s32.totalorder %s12, 4
      %p451 = pnand %p449, %p450
      %p452 = pneg %p451
      // Predicated region
      $region189: #{net_forward.3} parent=5 // pred_check
        _
      $region190: #{net_forward.3} parent=5 // pred_check_branch
        %454 = sbr.rel (%p451) target = $region192
      $region191: #{net_forward.3} parent=5 // pred_region
        %s455 = ssub.s32 %s12, 1
        %s456 = sand.u32 %s67, 1
        %s457 = sand.u32 %s67, 1
        %s458 = smul.addr %s457, 16
        %s459 = scalar_lea.vmem [#allocation2], %s458
        // Predicated region
        $region193: #{net_forward.3} parent=191 // pred_check
          %p460 = pneg %p80
        $region194: #{net_forward.3} parent=191 // pred_check_branch
          %462 = sbr.rel (%p460) target = $region196
        $region195: #{net_forward.3} parent=191 // pred_region
          _
        $region196: #{net_forward.3} parent=191 // pred_fallthru
          _
        %s463 = sand.u32 %s93, 1
        %s464 = sand.u32 %s93, 1
        %s465 = smul.addr %s464, 16
        %s466 = scalar_lea.vmem [#allocation3], %s465
        // Predicated region
        $region197: #{net_forward.3} parent=191 // pred_check
          %p467 = pneg %p106
        $region198: #{net_forward.3} parent=191 // pred_check_branch
          %469 = sbr.rel (%p467) target = $region200
        $region199: #{net_forward.3} parent=191 // pred_region
          _
        $region200: #{net_forward.3} parent=191 // pred_fallthru
          _
        %s470 = sand.u32 %s119, 1
        %s471 = sand.u32 %s119, 1
        %s472 = smul.addr %s471, 16
        %s473 = scalar_lea.vmem [#allocation4], %s472
        // Predicated region
        $region201: #{net_forward.3} parent=191 // pred_check
          %p474 = pneg %p132
        $region202: #{net_forward.3} parent=191 // pred_check_branch
          %476 = sbr.rel (%p474) target = $region204
        $region203: #{net_forward.3} parent=191 // pred_region
          _
        $region204: #{net_forward.3} parent=191 // pred_fallthru
          _
        %s477 = sand.u32 %s145, 1
        %s478 = sand.u32 %s145, 1
        %s479 = smul.addr %s478, 16
        %s480 = scalar_lea.vmem [#allocation5], %s479
        // Predicated region
        $region205: #{net_forward.3} parent=191 // pred_check
          %p481 = pneg %p158
        $region206: #{net_forward.3} parent=191 // pred_check_branch
          %483 = sbr.rel (%p481) target = $region208
        $region207: #{net_forward.3} parent=191 // pred_region
          _
        $region208: #{net_forward.3} parent=191 // pred_fallthru
          _
        %p484 = pneg %p33
        %p485 = pneg %p30
        %p486 = pneg %p54
        %p487 = pneg %p51
        %s488 = sand.u32 %s67, 1
        %s489 = sand.u32 %s67, 1
        %s490 = smul.addr %s489, 16
        %s491 = scalar_lea.vmem [#allocation2], %s490
        %p492 = pneg %p80
        %p493 = pneg %p77
        %s494 = sand.u32 %s93, 1
        %s495 = sand.u32 %s93, 1
        %s496 = smul.addr %s495, 16
        %s497 = scalar_lea.vmem [#allocation3], %s496
        %p498 = pneg %p106
        %p499 = pneg %p103
        %s500 = sand.u32 %s119, 1
        %s501 = sand.u32 %s119, 1
        %s502 = smul.addr %s501, 16
        %s503 = scalar_lea.vmem [#allocation4], %s502
        %p504 = pneg %p132
        %p505 = pneg %p129
        %s506 = sand.u32 %s145, 1
        %s507 = sand.u32 %s145, 1
        %s508 = smul.addr %s507, 16
        %s509 = scalar_lea.vmem [#allocation5], %s508
        %p510 = pneg %p158
        %p511 = pneg %p155
        %p512 = pneg %p184
        %p513 = pneg %p181
        %p514 = scmp.lt.s32.totalorder %s17, 2
        %s515 = scalar_select %p514, %s17, 2
        %s516 = smul.addr %s515, 4
        %s517 = scalar_lea.vmem %s6, %s516
        %p518 = scmp.lt.s32.totalorder %s17, 2
        %s519 = scalar_select %p518, %s17, 2
        %s520 = smul.addr %s519, 4
        %s521 = scalar_lea.vmem %s6, %s520
        %v523 = vld [vmem:[%s0] sm:$0x7]
        %v524 = vld [vmem:[%s459] sm:$0xf]
        %v525 = vld [vmem:[%s459 + $0x4] sm:$0xf]
        %v526 = vld [vmem:[%s459 + $0x8] sm:$0xf]
        %v527 = vld [vmem:[%s459 + $0xc] sm:$0x1]
        %v532 = vunpack.c.l.b16 %v524
        %v533 = vunpack.c.l.b16 %v525
        %v534 = vunpack.c.l.b16 %v526
        %v535 = vunpack.c.l.b16 %v527
        %v536 = vpack.c.b16 %v533, %v532
        %v537 = vpack.c.b16 %v535, %v534
        %vm539 = vcmask 203776
        %v541 = vsel %vm539, %v523, 0
        %vm543 = vcmask 1043456
        %vm544 = vcmask 1044480
        %v545 = vsel %vm543, 4294967295, 65535
        %v546 = vsel %vm544, %v545, 0
        %v548 = vand.u32 %v537, %v546
        %550 = vmatprep.subr.bf16.mxu0 0
        %551 = vmatpush1.bf16.msra.mxu0 %v536
        %552 = vmatprep.subr.bf16.mxu0 0
        %553 = vmatpush1.bf16.msra.mxu0 %v548
        %554 = vmatprep.subr.bf16.mxu0 0
        %555 = vmatpush1.bf16.msra.mxu0 0
        %556 = vmatprep.subr.bf16.mxu0 0
        %557 = vmatpush1.bf16.msra.mxu0 0
        %558 = vmatprep.subr.bf16.mxu0 0
        %559 = vmatpush1.bf16.msra.mxu0 0
        %560 = vmatprep.subr.bf16.mxu0 0
        %561 = vmatpush1.bf16.msra.mxu0 0
        %562 = vmatprep.subr.bf16.mxu0 0
        %563 = vmatpush1.bf16.msra.mxu0 0
        %564 = vmatprep.subr.bf16.mxu0 0
        %565 = vmatpush1.bf16.msra.mxu0 0
        %566 = vmatprep.subr.bf16.mxu0 0
        %567 = vmatpush1.bf16.msra.mxu0 0
        %568 = vmatprep.subr.bf16.mxu0 0
        %569 = vmatpush1.bf16.msra.mxu0 0
        %570 = vmatprep.subr.bf16.mxu0 0
        %571 = vmatpush1.bf16.msra.mxu0 0
        %572 = vmatprep.subr.bf16.mxu0 0
        %573 = vmatpush1.bf16.msra.mxu0 0
        %574 = vmatprep.subr.bf16.mxu0 0
        %575 = vmatpush1.bf16.msra.mxu0 0
        %576 = vmatprep.subr.bf16.mxu0 0
        %577 = vmatpush1.bf16.msra.mxu0 0
        %578 = vmatprep.subr.bf16.mxu0 0
        %579 = vmatpush1.bf16.msra.mxu0 0
        %580 = vmatprep.subr.bf16.mxu0 0
        %581 = vmatpush1.bf16.msra.mxu0 0
        %582 = vmatprep.mubr.bf16.mxu0 0
        %583 = vmatmul.mubr.bf16.gmra.mrb[0].mxu0 %v541
        %v584 = vpop.f32.mrb[0].mxu0
        %v585 = vadd.f32 0.0, %v584
        %v586 = vpop.f32.mrb[0].mxu0
        %v587 = vpop.f32.mrb[0].mxu0
        %v588 = vpop.f32.mrb[0].mxu0
        %589 = vdwg.mxu0
        %v590 = vld [vmem:[%s466] sm:$0xf]
        %v591 = vld [vmem:[%s466 + $0x4] sm:$0xf]
        %v592 = vld [vmem:[%s466 + $0x8] sm:$0xf]
        %v593 = vld [vmem:[%s466 + $0xc] sm:$0x1]
        %v598 = vunpack.c.l.b16 %v590
        %v599 = vunpack.c.l.b16 %v591
        %v600 = vunpack.c.l.b16 %v592
        %v601 = vunpack.c.l.b16 %v593
        %v602 = vpack.c.b16 %v599, %v598
        %v603 = vpack.c.b16 %v601, %v600
        %v606 = vand.u32 %v603, %v546
        %608 = vmatprep.subr.bf16.mxu0 0
        %609 = vmatpush1.bf16.msra.mxu0 %v602
        %610 = vmatprep.subr.bf16.mxu0 0
        %611 = vmatpush1.bf16.msra.mxu0 %v606
        %612 = vmatprep.subr.bf16.mxu0 0
        %613 = vmatpush1.bf16.msra.mxu0 0
        %614 = vmatprep.subr.bf16.mxu0 0
        %615 = vmatpush1.bf16.msra.mxu0 0
        %616 = vmatprep.subr.bf16.mxu0 0
        %617 = vmatpush1.bf16.msra.mxu0 0
        %618 = vmatprep.subr.bf16.mxu0 0
        %619 = vmatpush1.bf16.msra.mxu0 0
        %620 = vmatprep.subr.bf16.mxu0 0
        %621 = vmatpush1.bf16.msra.mxu0 0
        %622 = vmatprep.subr.bf16.mxu0 0
        %623 = vmatpush1.bf16.msra.mxu0 0
        %624 = vmatprep.subr.bf16.mxu0 0
        %625 = vmatpush1.bf16.msra.mxu0 0
        %626 = vmatprep.subr.bf16.mxu0 0
        %627 = vmatpush1.bf16.msra.mxu0 0
        %628 = vmatprep.subr.bf16.mxu0 0
        %629 = vmatpush1.bf16.msra.mxu0 0
        %630 = vmatprep.subr.bf16.mxu0 0
        %631 = vmatpush1.bf16.msra.mxu0 0
        %632 = vmatprep.subr.bf16.mxu0 0
        %633 = vmatpush1.bf16.msra.mxu0 0
        %634 = vmatprep.subr.bf16.mxu0 0
        %635 = vmatpush1.bf16.msra.mxu0 0
        %636 = vmatprep.subr.bf16.mxu0 0
        %637 = vmatpush1.bf16.msra.mxu0 0
        %638 = vmatprep.subr.bf16.mxu0 0
        %639 = vmatpush1.bf16.msra.mxu0 0
        %640 = vmatprep.mubr.bf16.mxu0 0
        %641 = vmatmul.mubr.bf16.gmra.mrb[0].mxu0 %v541
        %v642 = vpop.f32.mrb[0].mxu0
        %v643 = vadd.f32 0.0, %v642
        %v644 = vpop.f32.mrb[0].mxu0
        %v645 = vpop.f32.mrb[0].mxu0
        %v646 = vpop.f32.mrb[0].mxu0
        %647 = vdwg.mxu0
        %v648 = vmax.f32 %v585, %v643
        %v649 = vld [vmem:[%s473] sm:$0xf]
        %v650 = vld [vmem:[%s473 + $0x4] sm:$0xf]
        %v651 = vld [vmem:[%s473 + $0x8] sm:$0xf]
        %v652 = vld [vmem:[%s473 + $0xc] sm:$0x1]
        %v657 = vunpack.c.l.b16 %v649
        %v658 = vunpack.c.l.b16 %v650
        %v659 = vunpack.c.l.b16 %v651
        %v660 = vunpack.c.l.b16 %v652
        %v661 = vpack.c.b16 %v658, %v657
        %v662 = vpack.c.b16 %v660, %v659
        %v665 = vand.u32 %v662, %v546
        %667 = vmatprep.subr.bf16.mxu0 0
        %668 = vmatpush1.bf16.msra.mxu0 %v661
        %669 = vmatprep.subr.bf16.mxu0 0
        %670 = vmatpush1.bf16.msra.mxu0 %v665
        %671 = vmatprep.subr.bf16.mxu0 0
        %672 = vmatpush1.bf16.msra.mxu0 0
        %673 = vmatprep.subr.bf16.mxu0 0
        %674 = vmatpush1.bf16.msra.mxu0 0
        %675 = vmatprep.subr.bf16.mxu0 0
        %676 = vmatpush1.bf16.msra.mxu0 0
        %677 = vmatprep.subr.bf16.mxu0 0
        %678 = vmatpush1.bf16.msra.mxu0 0
        %679 = vmatprep.subr.bf16.mxu0 0
        %680 = vmatpush1.bf16.msra.mxu0 0
        %681 = vmatprep.subr.bf16.mxu0 0
        %682 = vmatpush1.bf16.msra.mxu0 0
        %683 = vmatprep.subr.bf16.mxu0 0
        %684 = vmatpush1.bf16.msra.mxu0 0
        %685 = vmatprep.subr.bf16.mxu0 0
        %686 = vmatpush1.bf16.msra.mxu0 0
        %687 = vmatprep.subr.bf16.mxu0 0
        %688 = vmatpush1.bf16.msra.mxu0 0
        %689 = vmatprep.subr.bf16.mxu0 0
        %690 = vmatpush1.bf16.msra.mxu0 0
        %691 = vmatprep.subr.bf16.mxu0 0
        %692 = vmatpush1.bf16.msra.mxu0 0
        %693 = vmatprep.subr.bf16.mxu0 0
        %694 = vmatpush1.bf16.msra.mxu0 0
        %695 = vmatprep.subr.bf16.mxu0 0
        %696 = vmatpush1.bf16.msra.mxu0 0
        %697 = vmatprep.subr.bf16.mxu0 0
        %698 = vmatpush1.bf16.msra.mxu0 0
        %699 = vmatprep.mubr.bf16.mxu0 0
        %700 = vmatmul.mubr.bf16.gmra.mrb[0].mxu0 %v541
        %v701 = vpop.f32.mrb[0].mxu0
        %v702 = vadd.f32 0.0, %v701
        %v703 = vpop.f32.mrb[0].mxu0
        %v704 = vpop.f32.mrb[0].mxu0
        %v705 = vpop.f32.mrb[0].mxu0
        %706 = vdwg.mxu0
        %v707 = vld [vmem:[%s480] sm:$0xf]
        %v708 = vld [vmem:[%s480 + $0x4] sm:$0xf]
        %v709 = vld [vmem:[%s480 + $0x8] sm:$0xf]
        %v710 = vld [vmem:[%s480 + $0xc] sm:$0x1]
        %v715 = vunpack.c.l.b16 %v707
        %v716 = vunpack.c.l.b16 %v708
        %v717 = vunpack.c.l.b16 %v709
        %v718 = vunpack.c.l.b16 %v710
        %v719 = vpack.c.b16 %v716, %v715
        %v720 = vpack.c.b16 %v718, %v717
        %v723 = vand.u32 %v720, %v546
        %725 = vmatprep.subr.bf16.mxu0 0
        %726 = vmatpush1.bf16.msra.mxu0 %v719
        %727 = vmatprep.subr.bf16.mxu0 0
        %728 = vmatpush1.bf16.msra.mxu0 %v723
        %729 = vmatprep.subr.bf16.mxu0 0
        %730 = vmatpush1.bf16.msra.mxu0 0
        %731 = vmatprep.subr.bf16.mxu0 0
        %732 = vmatpush1.bf16.msra.mxu0 0
        %733 = vmatprep.subr.bf16.mxu0 0
        %734 = vmatpush1.bf16.msra.mxu0 0
        %735 = vmatprep.subr.bf16.mxu0 0
        %736 = vmatpush1.bf16.msra.mxu0 0
        %737 = vmatprep.subr.bf16.mxu0 0
        %738 = vmatpush1.bf16.msra.mxu0 0
        %739 = vmatprep.subr.bf16.mxu0 0
        %740 = vmatpush1.bf16.msra.mxu0 0
        %741 = vmatprep.subr.bf16.mxu0 0
        %742 = vmatpush1.bf16.msra.mxu0 0
        %743 = vmatprep.subr.bf16.mxu0 0
        %744 = vmatpush1.bf16.msra.mxu0 0
        %745 = vmatprep.subr.bf16.mxu0 0
        %746 = vmatpush1.bf16.msra.mxu0 0
        %747 = vmatprep.subr.bf16.mxu0 0
        %748 = vmatpush1.bf16.msra.mxu0 0
        %749 = vmatprep.subr.bf16.mxu0 0
        %750 = vmatpush1.bf16.msra.mxu0 0
        %751 = vmatprep.subr.bf16.mxu0 0
        %752 = vmatpush1.bf16.msra.mxu0 0
        %753 = vmatprep.subr.bf16.mxu0 0
        %754 = vmatpush1.bf16.msra.mxu0 0
        %755 = vmatprep.subr.bf16.mxu0 0
        %756 = vmatpush1.bf16.msra.mxu0 0
        %757 = vmatprep.mubr.bf16.mxu0 0
        %758 = vmatmul.mubr.bf16.gmra.mrb[0].mxu0 %v541
        %v759 = vpop.f32.mrb[0].mxu0
        %v760 = vadd.f32 0.0, %v759
        %v761 = vpop.f32.mrb[0].mxu0
        %v762 = vpop.f32.mrb[0].mxu0
        %v763 = vpop.f32.mrb[0].mxu0
        %764 = vdwg.mxu0
        %v765 = vmax.f32 %v702, %v760
        %v766 = vmax.f32 %v648, %v765
        %v767 = vld [vmem:[%s1] sm:$0x3f]
        %769 = vset.pattern.permute.xlu0 0
        %770 = vperm.xlu0 %769, %v767
        %v771 = vpop.permute.xlu0 %770
        %v773 = vadd.f32 %v766, %v771
        %v774 = vmax.f32 %v773, 0.0
        %v775 = vpack.c.bf16 %v774, %v774
        %776 = vst [vmem:[%s521] sm:$0x7] %v775
        %p777 = scmp.lt.s32.totalorder %s17, 2
        %s778 = scalar_select %p777, %s17, 2
        %s779 = smul.addr %s778, 4
        %s780 = scalar_lea.vmem %s6, %s779
        // Predicated region
        $region209: #{net_forward.3} parent=191 // pred_check
          %p781 = pneg %p181
        $region210: #{net_forward.3} parent=191 // pred_check_branch
          %783 = sbr.rel (%p781) target = $region212
        $region211: #{net_forward.3} parent=191 // pred_region
          _
        $region212: #{net_forward.3} parent=191 // pred_fallthru
          _
      $region192: #{net_forward.3} parent=5 // pred_fallthru
        _
      %p784 = scmp.le.s32.totalorder 2, %s12
      // Predicated region
      $region213: #{net_forward.3} parent=5 // pred_check
        %p785 = pneg %p784
      $region214: #{net_forward.3} parent=5 // pred_check_branch
        %787 = sbr.rel (%p785) target = $region216
      $region215: #{net_forward.3} parent=5 // pred_region
        %s788 = ssub.s32 %s12, 2
        // Predicated region
        $region217: #{net_forward.3} parent=215 // pred_check
          %p789 = pneg %p187
        $region218: #{net_forward.3} parent=215 // pred_check_branch
          %791 = sbr.rel (%p789) target = $region220
        $region219: #{net_forward.3} parent=215 // pred_region
          %p792 = scmp.lt.s32.totalorder %s18, 2
          %s793 = scalar_select %p792, %s18, 2
          %s794 = smul.addr %s793, 4
          %s795 = scalar_lea.vmem %s6, %s794
        $region220: #{net_forward.3} parent=215 // pred_fallthru
          _
      $region216: #{net_forward.3} parent=5 // pred_fallthru
        _
    $region6: #{net_forward.3} parent=1 // loop_footer
      %s16 = sadd.s32 1, %s12
    $region7: #{net_forward.3} parent=1 // loop_footer_branch
      %11 = sbr.rel target = $region3
    $region8: #{net_forward.3} parent=1 // loop_exit
      _

// kernel: net_forward.4
$region0: #{net_forward.4}
  #allocation0 [shape = 'u32[]', space=smem, size = 0x4, offset = 0x4, fixed_abs, tag = 'smem constant byte address 0x4 - core index']
  #allocation1 [shape = 'u32[144,128]{1,0:T(1,128)}', space=vmem, size = 0x12000, scoped, tag = 'internal scratch']
  %s0 = inlined_call_operand.vmem [shape: bf16[16,150], index: 0, kind: input, shape index: {}]
  %s1 = inlined_call_operand.vmem [shape: f32[16,1], index: 1, kind: input, shape index: {}]
  %s2 = inlined_call_operand.vmem [shape: bf16[150,128], index: 2, kind: input, shape index: {}]
  %s3 = inlined_call_operand.vmem [shape: bf16[150,128], index: 3, kind: input, shape index: {}]
  %s4 = inlined_call_operand.vmem [shape: bf16[150,128], index: 4, kind: input, shape index: {}]
  %s5 = inlined_call_operand.vmem [shape: bf16[150,128], index: 5, kind: input, shape index: {}]
  %s6 = inlined_call_operand.vmem [shape: bf16[16,128], index: 6, kind: output, shape index: {}]
  %s7 = sld [smem:[#allocation0]]
  $region34: #{net_forward.4} parent=0
    _
  %s9 = ssub.s32 1, %s7
  %s10 = scalar_select 0, %s9, %s7
  // Predicated region
  $region2: #{net_forward.4} parent=0 // pred_check
    _
  $region3: #{net_forward.4} parent=0 // pred_check_branch
    %12 = sbr.rel (0) target = $region5
  $region4: #{net_forward.4} parent=0 // pred_region
    _
  $region5: #{net_forward.4} parent=0 // pred_fallthru
    _
  // Predicated region
  $region6: #{net_forward.4} parent=0 // pred_check
    _
  $region7: #{net_forward.4} parent=0 // pred_check_branch
    %14 = sbr.rel (0) target = $region9
  $region8: #{net_forward.4} parent=0 // pred_region
    _
  $region9: #{net_forward.4} parent=0 // pred_fallthru
    _
  // Predicated region
  $region10: #{net_forward.4} parent=0 // pred_check
    _
  $region11: #{net_forward.4} parent=0 // pred_check_branch
    %16 = sbr.rel (0) target = $region13
  $region12: #{net_forward.4} parent=0 // pred_region
    _
  $region13: #{net_forward.4} parent=0 // pred_fallthru
    _
  // Predicated region
  $region14: #{net_forward.4} parent=0 // pred_check
    _
  $region15: #{net_forward.4} parent=0 // pred_check_branch
    %18 = sbr.rel (0) target = $region17
  $region16: #{net_forward.4} parent=0 // pred_region
    _
  $region17: #{net_forward.4} parent=0 // pred_fallthru
    _
  // Predicated region
  $region18: #{net_forward.4} parent=0 // pred_check
    _
  $region19: #{net_forward.4} parent=0 // pred_check_branch
    %20 = sbr.rel (0) target = $region21
  $region20: #{net_forward.4} parent=0 // pred_region
    _
  $region21: #{net_forward.4} parent=0 // pred_fallthru
    _
  // Predicated region
  $region22: #{net_forward.4} parent=0 // pred_check
    _
  $region23: #{net_forward.4} parent=0 // pred_check_branch
    %22 = sbr.rel (0) target = $region25
  $region24: #{net_forward.4} parent=0 // pred_region
    _
  $region25: #{net_forward.4} parent=0 // pred_fallthru
    _
  %v24 = vld [vmem:[%s0] sm:$0xff]
  %v25 = vld [vmem:[%s0 + $0x8] sm:$0xff]
  %v26 = vld [vmem:[%s2] sm:$0xf]
  %v27 = vld [vmem:[%s2 + $0x4] sm:$0xf]
  %v28 = vld [vmem:[%s2 + $0x8] sm:$0xf]
  %v29 = vld [vmem:[%s2 + $0xc] sm:$0xf]
  %v30 = vld [vmem:[%s2 + $0x10] sm:$0xf]
  %v31 = vld [vmem:[%s2 + $0x14] sm:$0xf]
  %v32 = vld [vmem:[%s2 + $0x18] sm:$0xf]
  %v33 = vld [vmem:[%s2 + $0x1c] sm:$0xf]
  %v34 = vld [vmem:[%s2 + $0x20] sm:$0xf]
  %v35 = vld [vmem:[%s2 + $0x24] sm:$0xf]
  %v36 = vld [vmem:[%s2 + $0x28] sm:$0xf]
  %v37 = vld [vmem:[%s2 + $0x2c] sm:$0xf]
  %v38 = vld [vmem:[%s2 + $0x30] sm:$0xf]
  %v39 = vld [vmem:[%s2 + $0x34] sm:$0xf]
  %v40 = vld [vmem:[%s2 + $0x38] sm:$0xf]
  %v41 = vld [vmem:[%s2 + $0x3c] sm:$0xf]
  %v42 = vld [vmem:[%s2 + $0x40] sm:$0xf]
  %v43 = vld [vmem:[%s2 + $0x44] sm:$0xf]
  %v44 = vld [vmem:[%s2 + $0x48] sm:$0x7]
  %v47 = vunpack.c.l.b16 %v24
  %v48 = vunpack.c.h.b16 %v24
  %v49 = vunpack.c.l.b16 %v25
  %v50 = vunpack.c.h.b16 %v25
  %v51 = vpack.c.b16 %v49, %v47
  %v52 = vpack.c.b16 %v50, %v48
  %v73 = vunpack.c.l.b16 %v26
  %v74 = vunpack.c.l.b16 %v27
  %v75 = vunpack.c.l.b16 %v28
  %v76 = vunpack.c.l.b16 %v29
  %v77 = vunpack.c.l.b16 %v30
  %v78 = vunpack.c.l.b16 %v31
  %v79 = vunpack.c.l.b16 %v32
  %v80 = vunpack.c.l.b16 %v33
  %v81 = vunpack.c.l.b16 %v34
  %v82 = vunpack.c.l.b16 %v35
  %v83 = vunpack.c.l.b16 %v36
  %v84 = vunpack.c.l.b16 %v37
  %v85 = vunpack.c.l.b16 %v38
  %v86 = vunpack.c.l.b16 %v39
  %v87 = vunpack.c.l.b16 %v40
  %v88 = vunpack.c.l.b16 %v41
  %v89 = vunpack.c.l.b16 %v42
  %v90 = vunpack.c.l.b16 %v43
  %v91 = vunpack.c.l.b16 %v44
  %v92 = vpack.c.b16 %v74, %v73
  %v93 = vpack.c.b16 %v76, %v75
  %v94 = vpack.c.b16 %v78, %v77
  %v95 = vpack.c.b16 %v80, %v79
  %v96 = vpack.c.b16 %v82, %v81
  %v97 = vpack.c.b16 %v84, %v83
  %v98 = vpack.c.b16 %v86, %v85
  %v99 = vpack.c.b16 %v88, %v87
  %v100 = vpack.c.b16 %v90, %v89
  %v101 = vpack.c.b16 %v91, %v91
  %vm111 = vcmask 179200
  %v113 = vsel %vm111, %v52, 0
  %vm115 = vcmask 1042432
  %v117 = vsel %vm115, %v101, 0
  %119 = vmatprep.subr.bf16.mxu0 0
  %120 = vmatpush1.bf16.msra.mxu0 %v92
  %121 = vmatprep.subr.bf16.mxu0 0
  %122 = vmatpush1.bf16.msra.mxu0 %v93
  %123 = vmatprep.subr.bf16.mxu0 0
  %124 = vmatpush1.bf16.msra.mxu0 %v94
  %125 = vmatprep.subr.bf16.mxu0 0
  %126 = vmatpush1.bf16.msra.mxu0 %v95
  %127 = vmatprep.subr.bf16.mxu0 0
  %128 = vmatpush1.bf16.msra.mxu0 %v96
  %129 = vmatprep.subr.bf16.mxu0 0
  %130 = vmatpush1.bf16.msra.mxu0 %v97
  %131 = vmatprep.subr.bf16.mxu0 0
  %132 = vmatpush1.bf16.msra.mxu0 %v98
  %133 = vmatprep.subr.bf16.mxu0 0
  %134 = vmatpush1.bf16.msra.mxu0 %v99
  %135 = vmatprep.subr.bf16.mxu0 0
  %136 = vmatpush1.bf16.msra.mxu0 %v100
  %137 = vmatprep.subr.bf16.mxu0 0
  %138 = vmatpush1.bf16.msra.mxu0 %v117
  %139 = vmatprep.subr.bf16.mxu0 0
  %140 = vmatpush1.bf16.msra.mxu0 0
  %141 = vmatprep.subr.bf16.mxu0 0
  %142 = vmatpush1.bf16.msra.mxu0 0
  %143 = vmatprep.subr.bf16.mxu0 0
  %144 = vmatpush1.bf16.msra.mxu0 0
  %145 = vmatprep.subr.bf16.mxu0 0
  %146 = vmatpush1.bf16.msra.mxu0 0
  %147 = vmatprep.subr.bf16.mxu0 0
  %148 = vmatpush1.bf16.msra.mxu0 0
  %149 = vmatprep.subr.bf16.mxu0 0
  %150 = vmatpush1.bf16.msra.mxu0 0
  %151 = vmatprep.mubr.bf16.mxu0 %v113
  %152 = vmatmul.mubr.bf16.gmra.mrb[0].mxu0 %v51
  %v153 = vpop.f32.mrb[0].mxu0
  %v154 = vadd.f32 0.0, %v153
  %v155 = vpop.f32.mrb[0].mxu0
  %v156 = vpop.f32.mrb[0].mxu0
  %v157 = vadd.f32 0.0, %v156
  %v158 = vpop.f32.mrb[0].mxu0
  %159 = vdwg.mxu0
  %v160 = vld [vmem:[%s3] sm:$0xf]
  %v161 = vld [vmem:[%s3 + $0x4] sm:$0xf]
  %v162 = vld [vmem:[%s3 + $0x8] sm:$0xf]
  %v163 = vld [vmem:[%s3 + $0xc] sm:$0xf]
  %v164 = vld [vmem:[%s3 + $0x10] sm:$0xf]
  %v165 = vld [vmem:[%s3 + $0x14] sm:$0xf]
  %v166 = vld [vmem:[%s3 + $0x18] sm:$0xf]
  %v167 = vld [vmem:[%s3 + $0x1c] sm:$0xf]
  %v168 = vld [vmem:[%s3 + $0x20] sm:$0xf]
  %v169 = vld [vmem:[%s3 + $0x24] sm:$0xf]
  %v170 = vld [vmem:[%s3 + $0x28] sm:$0xf]
  %v171 = vld [vmem:[%s3 + $0x2c] sm:$0xf]
  %v172 = vld [vmem:[%s3 + $0x30] sm:$0xf]
  %v173 = vld [vmem:[%s3 + $0x34] sm:$0xf]
  %v174 = vld [vmem:[%s3 + $0x38] sm:$0xf]
  %v175 = vld [vmem:[%s3 + $0x3c] sm:$0xf]
  %v176 = vld [vmem:[%s3 + $0x40] sm:$0xf]
  %v177 = vld [vmem:[%s3 + $0x44] sm:$0xf]
  %v178 = vld [vmem:[%s3 + $0x48] sm:$0x7]
  %v198 = vunpack.c.l.b16 %v160
  %v199 = vunpack.c.l.b16 %v161
  %v200 = vunpack.c.l.b16 %v162
  %v201 = vunpack.c.l.b16 %v163
  %v202 = vunpack.c.l.b16 %v164
  %v203 = vunpack.c.l.b16 %v165
  %v204 = vunpack.c.l.b16 %v166
  %v205 = vunpack.c.l.b16 %v167
  %v206 = vunpack.c.l.b16 %v168
  %v207 = vunpack.c.l.b16 %v169
  %v208 = vunpack.c.l.b16 %v170
  %v209 = vunpack.c.l.b16 %v171
  %v210 = vunpack.c.l.b16 %v172
  %v211 = vunpack.c.l.b16 %v173
  %v212 = vunpack.c.l.b16 %v174
  %v213 = vunpack.c.l.b16 %v175
  %v214 = vunpack.c.l.b16 %v176
  %v215 = vunpack.c.l.b16 %v177
  %v216 = vunpack.c.l.b16 %v178
  %v217 = vpack.c.b16 %v199, %v198
  %v218 = vpack.c.b16 %v201, %v200
  %v219 = vpack.c.b16 %v203, %v202
  %v220 = vpack.c.b16 %v205, %v204
  %v221 = vpack.c.b16 %v207, %v206
  %v222 = vpack.c.b16 %v209, %v208
  %v223 = vpack.c.b16 %v211, %v210
  %v224 = vpack.c.b16 %v213, %v212
  %v225 = vpack.c.b16 %v215, %v214
  %v226 = vpack.c.b16 %v216, %v216
  %v237 = vsel %vm115, %v226, 0
  %239 = vmatprep.subr.bf16.mxu0 0
  %240 = vmatpush1.bf16.msra.mxu0 %v217
  %241 = vmatprep.subr.bf16.mxu0 0
  %242 = vmatpush1.bf16.msra.mxu0 %v218
  %243 = vmatprep.subr.bf16.mxu0 0
  %244 = vmatpush1.bf16.msra.mxu0 %v219
  %245 = vmatprep.subr.bf16.mxu0 0
  %246 = vmatpush1.bf16.msra.mxu0 %v220
  %247 = vmatprep.subr.bf16.mxu0 0
  %248 = vmatpush1.bf16.msra.mxu0 %v221
  %249 = vmatprep.subr.bf16.mxu0 0
  %250 = vmatpush1.bf16.msra.mxu0 %v222
  %251 = vmatprep.subr.bf16.mxu0 0
  %252 = vmatpush1.bf16.msra.mxu0 %v223
  %253 = vmatprep.subr.bf16.mxu0 0
  %254 = vmatpush1.bf16.msra.mxu0 %v224
  %255 = vmatprep.subr.bf16.mxu0 0
  %256 = vmatpush1.bf16.msra.mxu0 %v225
  %257 = vmatprep.subr.bf16.mxu0 0
  %258 = vmatpush1.bf16.msra.mxu0 %v237
  %259 = vmatprep.subr.bf16.mxu0 0
  %260 = vmatpush1.bf16.msra.mxu0 0
  %261 = vmatprep.subr.bf16.mxu0 0
  %262 = vmatpush1.bf16.msra.mxu0 0
  %263 = vmatprep.subr.bf16.mxu0 0
  %264 = vmatpush1.bf16.msra.mxu0 0
  %265 = vmatprep.subr.bf16.mxu0 0
  %266 = vmatpush1.bf16.msra.mxu0 0
  %267 = vmatprep.subr.bf16.mxu0 0
  %268 = vmatpush1.bf16.msra.mxu0 0
  %269 = vmatprep.subr.bf16.mxu0 0
  %270 = vmatpush1.bf16.msra.mxu0 0
  %271 = vmatprep.mubr.bf16.mxu0 %v113
  %272 = vmatmul.mubr.bf16.gmra.mrb[0].mxu0 %v51
  %v273 = vpop.f32.mrb[0].mxu0
  %v274 = vadd.f32 0.0, %v273
  %v275 = vpop.f32.mrb[0].mxu0
  %v276 = vpop.f32.mrb[0].mxu0
  %v277 = vadd.f32 0.0, %v276
  %v278 = vpop.f32.mrb[0].mxu0
  %279 = vdwg.mxu0
  %v280 = vmax.f32 %v154, %v274
  %v281 = vmax.f32 %v157, %v277
  %v282 = vld [vmem:[%s4] sm:$0xf]
  %v283 = vld [vmem:[%s4 + $0x4] sm:$0xf]
  %v284 = vld [vmem:[%s4 + $0x8] sm:$0xf]
  %v285 = vld [vmem:[%s4 + $0xc] sm:$0xf]
  %v286 = vld [vmem:[%s4 + $0x10] sm:$0xf]
  %v287 = vld [vmem:[%s4 + $0x14] sm:$0xf]
  %v288 = vld [vmem:[%s4 + $0x18] sm:$0xf]
  %v289 = vld [vmem:[%s4 + $0x1c] sm:$0xf]
  %v290 = vld [vmem:[%s4 + $0x20] sm:$0xf]
  %v291 = vld [vmem:[%s4 + $0x24] sm:$0xf]
  %v292 = vld [vmem:[%s4 + $0x28] sm:$0xf]
  %v293 = vld [vmem:[%s4 + $0x2c] sm:$0xf]
  %v294 = vld [vmem:[%s4 + $0x30] sm:$0xf]
  %v295 = vld [vmem:[%s4 + $0x34] sm:$0xf]
  %v296 = vld [vmem:[%s4 + $0x38] sm:$0xf]
  %v297 = vld [vmem:[%s4 + $0x3c] sm:$0xf]
  %v298 = vld [vmem:[%s4 + $0x40] sm:$0xf]
  %v299 = vld [vmem:[%s4 + $0x44] sm:$0xf]
  %v300 = vld [vmem:[%s4 + $0x48] sm:$0x7]
  %v320 = vunpack.c.l.b16 %v282
  %v321 = vunpack.c.l.b16 %v283
  %v322 = vunpack.c.l.b16 %v284
  %v323 = vunpack.c.l.b16 %v285
  %v324 = vunpack.c.l.b16 %v286
  %v325 = vunpack.c.l.b16 %v287
  %v326 = vunpack.c.l.b16 %v288
  %v327 = vunpack.c.l.b16 %v289
  %v328 = vunpack.c.l.b16 %v290
  %v329 = vunpack.c.l.b16 %v291
  %v330 = vunpack.c.l.b16 %v292
  %v331 = vunpack.c.l.b16 %v293
  %v332 = vunpack.c.l.b16 %v294
  %v333 = vunpack.c.l.b16 %v295
  %v334 = vunpack.c.l.b16 %v296
  %v335 = vunpack.c.l.b16 %v297
  %v336 = vunpack.c.l.b16 %v298
  %v337 = vunpack.c.l.b16 %v299
  %v338 = vunpack.c.l.b16 %v300
  %v339 = vpack.c.b16 %v321, %v320
  %v340 = vpack.c.b16 %v323, %v322
  %v341 = vpack.c.b16 %v325, %v324
  %v342 = vpack.c.b16 %v327, %v326
  %v343 = vpack.c.b16 %v329, %v328
  %v344 = vpack.c.b16 %v331, %v330
  %v345 = vpack.c.b16 %v333, %v332
  %v346 = vpack.c.b16 %v335, %v334
  %v347 = vpack.c.b16 %v337, %v336
  %v348 = vpack.c.b16 %v338, %v338
  %v359 = vsel %vm115, %v348, 0
  %361 = vmatprep.subr.bf16.mxu0 0
  %362 = vmatpush1.bf16.msra.mxu0 %v339
  %363 = vmatprep.subr.bf16.mxu0 0
  %364 = vmatpush1.bf16.msra.mxu0 %v340
  %365 = vmatprep.subr.bf16.mxu0 0
  %366 = vmatpush1.bf16.msra.mxu0 %v341
  %367 = vmatprep.subr.bf16.mxu0 0
  %368 = vmatpush1.bf16.msra.mxu0 %v342
  %369 = vmatprep.subr.bf16.mxu0 0
  %370 = vmatpush1.bf16.msra.mxu0 %v343
  %371 = vmatprep.subr.bf16.mxu0 0
  %372 = vmatpush1.bf16.msra.mxu0 %v344
  %373 = vmatprep.subr.bf16.mxu0 0
  %374 = vmatpush1.bf16.msra.mxu0 %v345
  %375 = vmatprep.subr.bf16.mxu0 0
  %376 = vmatpush1.bf16.msra.mxu0 %v346
  %377 = vmatprep.subr.bf16.mxu0 0
  %378 = vmatpush1.bf16.msra.mxu0 %v347
  %379 = vmatprep.subr.bf16.mxu0 0
  %380 = vmatpush1.bf16.msra.mxu0 %v359
  %381 = vmatprep.subr.bf16.mxu0 0
  %382 = vmatpush1.bf16.msra.mxu0 0
  %383 = vmatprep.subr.bf16.mxu0 0
  %384 = vmatpush1.bf16.msra.mxu0 0
  %385 = vmatprep.subr.bf16.mxu0 0
  %386 = vmatpush1.bf16.msra.mxu0 0
  %387 = vmatprep.subr.bf16.mxu0 0
  %388 = vmatpush1.bf16.msra.mxu0 0
  %389 = vmatprep.subr.bf16.mxu0 0
  %390 = vmatpush1.bf16.msra.mxu0 0
  %391 = vmatprep.subr.bf16.mxu0 0
  %392 = vmatpush1.bf16.msra.mxu0 0
  %393 = vmatprep.mubr.bf16.mxu0 %v113
  %394 = vmatmul.mubr.bf16.gmra.mrb[0].mxu0 %v51
  %v395 = vpop.f32.mrb[0].mxu0
  %v396 = vadd.f32 0.0, %v395
  %v397 = vpop.f32.mrb[0].mxu0
  %v398 = vpop.f32.mrb[0].mxu0
  %v399 = vadd.f32 0.0, %v398
  %v400 = vpop.f32.mrb[0].mxu0
  %401 = vdwg.mxu0
  %v402 = vld [vmem:[%s5] sm:$0xf]
  %v403 = vld [vmem:[%s5 + $0x4] sm:$0xf]
  %v404 = vld [vmem:[%s5 + $0x8] sm:$0xf]
  %v405 = vld [vmem:[%s5 + $0xc] sm:$0xf]
  %v406 = vld [vmem:[%s5 + $0x10] sm:$0xf]
  %v407 = vld [vmem:[%s5 + $0x14] sm:$0xf]
  %v408 = vld [vmem:[%s5 + $0x18] sm:$0xf]
  %v409 = vld [vmem:[%s5 + $0x1c] sm:$0xf]
  %v410 = vld [vmem:[%s5 + $0x20] sm:$0xf]
  %v411 = vld [vmem:[%s5 + $0x24] sm:$0xf]
  %v412 = vld [vmem:[%s5 + $0x28] sm:$0xf]
  %v413 = vld [vmem:[%s5 + $0x2c] sm:$0xf]
  %v414 = vld [vmem:[%s5 + $0x30] sm:$0xf]
  %v415 = vld [vmem:[%s5 + $0x34] sm:$0xf]
  %v416 = vld [vmem:[%s5 + $0x38] sm:$0xf]
  %v417 = vld [vmem:[%s5 + $0x3c] sm:$0xf]
  %v418 = vld [vmem:[%s5 + $0x40] sm:$0xf]
  %v419 = vld [vmem:[%s5 + $0x44] sm:$0xf]
  %v420 = vld [vmem:[%s5 + $0x48] sm:$0x7]
  %v440 = vunpack.c.l.b16 %v402
  %v441 = vunpack.c.l.b16 %v403
  %v442 = vunpack.c.l.b16 %v404
  %v443 = vunpack.c.l.b16 %v405
  %v444 = vunpack.c.l.b16 %v406
  %v445 = vunpack.c.l.b16 %v407
  %v446 = vunpack.c.l.b16 %v408
  %v447 = vunpack.c.l.b16 %v409
  %v448 = vunpack.c.l.b16 %v410
  %v449 = vunpack.c.l.b16 %v411
  %v450 = vunpack.c.l.b16 %v412
  %v451 = vunpack.c.l.b16 %v413
  %v452 = vunpack.c.l.b16 %v414
  %v453 = vunpack.c.l.b16 %v415
  %v454 = vunpack.c.l.b16 %v416
  %v455 = vunpack.c.l.b16 %v417
  %v456 = vunpack.c.l.b16 %v418
  %v457 = vunpack.c.l.b16 %v419
  %v458 = vunpack.c.l.b16 %v420
  %v459 = vpack.c.b16 %v441, %v440
  %v460 = vpack.c.b16 %v443, %v442
  %v461 = vpack.c.b16 %v445, %v444
  %v462 = vpack.c.b16 %v447, %v446
  %v463 = vpack.c.b16 %v449, %v448
  %v464 = vpack.c.b16 %v451, %v450
  %v465 = vpack.c.b16 %v453, %v452
  %v466 = vpack.c.b16 %v455, %v454
  %v467 = vpack.c.b16 %v457, %v456
  %v468 = vpack.c.b16 %v458, %v458
  %v479 = vsel %vm115, %v468, 0
  %481 = vmatprep.subr.bf16.mxu0 0
  %482 = vmatpush1.bf16.msra.mxu0 %v459
  %483 = vmatprep.subr.bf16.mxu0 0
  %484 = vmatpush1.bf16.msra.mxu0 %v460
  %485 = vmatprep.subr.bf16.mxu0 0
  %486 = vmatpush1.bf16.msra.mxu0 %v461
  %487 = vmatprep.subr.bf16.mxu0 0
  %488 = vmatpush1.bf16.msra.mxu0 %v462
  %489 = vmatprep.subr.bf16.mxu0 0
  %490 = vmatpush1.bf16.msra.mxu0 %v463
  %491 = vmatprep.subr.bf16.mxu0 0
  %492 = vmatpush1.bf16.msra.mxu0 %v464
  %493 = vmatprep.subr.bf16.mxu0 0
  %494 = vmatpush1.bf16.msra.mxu0 %v465
  %495 = vmatprep.subr.bf16.mxu0 0
  %496 = vmatpush1.bf16.msra.mxu0 %v466
  %497 = vmatprep.subr.bf16.mxu0 0
  %498 = vmatpush1.bf16.msra.mxu0 %v467
  %499 = vmatprep.subr.bf16.mxu0 0
  %500 = vmatpush1.bf16.msra.mxu0 %v479
  %501 = vmatprep.subr.bf16.mxu0 0
  %502 = vmatpush1.bf16.msra.mxu0 0
  %503 = vmatprep.subr.bf16.mxu0 0
  %504 = vmatpush1.bf16.msra.mxu0 0
  %505 = vmatprep.subr.bf16.mxu0 0
  %506 = vmatpush1.bf16.msra.mxu0 0
  %507 = vmatprep.subr.bf16.mxu0 0
  %508 = vmatpush1.bf16.msra.mxu0 0
  %509 = vmatprep.subr.bf16.mxu0 0
  %510 = vmatpush1.bf16.msra.mxu0 0
  %511 = vmatprep.subr.bf16.mxu0 0
  %512 = vmatpush1.bf16.msra.mxu0 0
  %513 = vmatprep.mubr.bf16.mxu0 %v113
  %514 = vmatmul.mubr.bf16.gmra.mrb[0].mxu0 %v51
  %v515 = vpop.f32.mrb[0].mxu0
  %v516 = vadd.f32 0.0, %v515
  %v517 = vpop.f32.mrb[0].mxu0
  %v518 = vpop.f32.mrb[0].mxu0
  %v519 = vadd.f32 0.0, %v518
  %v520 = vpop.f32.mrb[0].mxu0
  %521 = vdwg.mxu0
  %v522 = vmax.f32 %v396, %v516
  %v523 = vmax.f32 %v399, %v519
  %v524 = vmax.f32 %v280, %v522
  %v525 = vmax.f32 %v281, %v523
  %v526 = vld [vmem:[%s1] sm:$0xff]
  %v527 = vld [vmem:[%s1 + $0x8] sm:$0xff]
  %529 = vset.pattern.permute.xlu0 0
  %530 = vperm.xlu0 %529, %v526
  %v531 = vpop.permute.xlu0 %530
  %534 = vset.pattern.permute.xlu0 0
  %535 = vperm.xlu0 %534, %v527
  %v536 = vpop.permute.xlu0 %535
  %v538 = vadd.f32 %v524, %v531
  %v539 = vadd.f32 %v525, %v536
  %v540 = vmax.f32 %v538, 0.0
  %v541 = vmax.f32 %v539, 0.0
  %v542 = vpack.c.bf16 %v541, %v540
  %v544 = vunpack.c.l.b16 %v542
  %v545 = vunpack.c.h.b16 %v542
  %v546 = vpack.c.b16 %v544, %v544
  %v547 = vpack.c.b16 %v545, %v545
  %550 = vst [vmem:[%s6] sm:$0xf] %v546
  %551 = vst [vmem:[%s6 + $0x4] sm:$0xf] %v547
  // Predicated region
  $region26: #{net_forward.4} parent=0 // pred_check
    _
  $region27: #{net_forward.4} parent=0 // pred_check_branch
    %553 = sbr.rel (0) target = $region29
  $region28: #{net_forward.4} parent=0 // pred_region
    _
  $region29: #{net_forward.4} parent=0 // pred_fallthru
    _
  // Predicated region
  $region30: #{net_forward.4} parent=0 // pred_check
    _
  $region31: #{net_forward.4} parent=0 // pred_check_branch
    %555 = sbr.rel (0) target = $region33
  $region32: #{net_forward.4} parent=0 // pred_region
    _
  $region33: #{net_forward.4} parent=0 // pred_fallthru
    _

// kernel: net_forward.5
$region0: #{net_forward.5}
  #allocation0 [shape = 'u32[]', space=smem, size = 0x4, offset = 0x4, fixed_abs, tag = 'smem constant byte address 0x4 - core index']
  #allocation1 [shape = 'u32[144,128]{1,0:T(1,128)}', space=vmem, size = 0x12000, scoped, tag = 'internal scratch']
  %s0 = inlined_call_operand.vmem [shape: bf16[256,128], index: 0, kind: input, shape index: {}]
  %s1 = inlined_call_operand.vmem [shape: bf16[120,256], index: 1, kind: input, shape index: {}]
  %s2 = inlined_call_operand.vmem [shape: f32[120,1], index: 2, kind: input, shape index: {}]
  %s3 = inlined_call_operand.vmem [shape: bf16[84,120], index: 3, kind: input, shape index: {}]
  %s4 = inlined_call_operand.vmem [shape: f32[84,1], index: 4, kind: input, shape index: {}]
  %s5 = inlined_call_operand.vmem [shape: bf16[10,84], index: 5, kind: input, shape index: {}]
  %s6 = inlined_call_operand.vmem [shape: f32[10,1], index: 6, kind: input, shape index: {}]
  %s7 = inlined_call_operand.vmem [shape: f32[10,128], index: 7, kind: output, shape index: {}]
  %s8 = sld [smem:[#allocation0]]
  $region38: #{net_forward.5} parent=0
    _
  %s10 = ssub.s32 1, %s8
  %s11 = scalar_select 0, %s10, %s8
  // Predicated region
  $region2: #{net_forward.5} parent=0 // pred_check
    _
  $region3: #{net_forward.5} parent=0 // pred_check_branch
    %13 = sbr.rel (0) target = $region5
  $region4: #{net_forward.5} parent=0 // pred_region
    _
  $region5: #{net_forward.5} parent=0 // pred_fallthru
    _
  // Predicated region
  $region6: #{net_forward.5} parent=0 // pred_check
    _
  $region7: #{net_forward.5} parent=0 // pred_check_branch
    %15 = sbr.rel (0) target = $region9
  $region8: #{net_forward.5} parent=0 // pred_region
    _
  $region9: #{net_forward.5} parent=0 // pred_fallthru
    _
  // Predicated region
  $region10: #{net_forward.5} parent=0 // pred_check
    _
  $region11: #{net_forward.5} parent=0 // pred_check_branch
    %17 = sbr.rel (0) target = $region13
  $region12: #{net_forward.5} parent=0 // pred_region
    _
  $region13: #{net_forward.5} parent=0 // pred_fallthru
    _
  // Predicated region
  $region14: #{net_forward.5} parent=0 // pred_check
    _
  $region15: #{net_forward.5} parent=0 // pred_check_branch
    %19 = sbr.rel (0) target = $region17
  $region16: #{net_forward.5} parent=0 // pred_region
    _
  $region17: #{net_forward.5} parent=0 // pred_fallthru
    _
  // Predicated region
  $region18: #{net_forward.5} parent=0 // pred_check
    _
  $region19: #{net_forward.5} parent=0 // pred_check_branch
    %21 = sbr.rel (0) target = $region21
  $region20: #{net_forward.5} parent=0 // pred_region
    _
  $region21: #{net_forward.5} parent=0 // pred_fallthru
    _
  // Predicated region
  $region22: #{net_forward.5} parent=0 // pred_check
    _
  $region23: #{net_forward.5} parent=0 // pred_check_branch
    %23 = sbr.rel (0) target = $region25
  $region24: #{net_forward.5} parent=0 // pred_region
    _
  $region25: #{net_forward.5} parent=0 // pred_fallthru
    _
  // Predicated region
  $region26: #{net_forward.5} parent=0 // pred_check
    _
  $region27: #{net_forward.5} parent=0 // pred_check_branch
    %25 = sbr.rel (0) target = $region29
  $region28: #{net_forward.5} parent=0 // pred_region
    _
  $region29: #{net_forward.5} parent=0 // pred_fallthru
    _
  %v27 = vld [vmem:[%s1] sm:$0xff]
  %v28 = vld [vmem:[%s1 + $0x8] sm:$0xff]
  %v29 = vld [vmem:[%s1 + $0x10] sm:$0xff]
  %v30 = vld [vmem:[%s1 + $0x18] sm:$0xff]
  %v31 = vld [vmem:[%s1 + $0x20] sm:$0xff]
  %v32 = vld [vmem:[%s1 + $0x28] sm:$0xff]
  %v33 = vld [vmem:[%s1 + $0x30] sm:$0xff]
  %v34 = vld [vmem:[%s1 + $0x38] sm:$0xff]
  %v35 = vld [vmem:[%s1 + $0x40] sm:$0xff]
  %v36 = vld [vmem:[%s1 + $0x48] sm:$0xff]
  %v37 = vld [vmem:[%s1 + $0x50] sm:$0xff]
  %v38 = vld [vmem:[%s1 + $0x58] sm:$0xff]
  %v39 = vld [vmem:[%s1 + $0x60] sm:$0xff]
  %v40 = vld [vmem:[%s1 + $0x68] sm:$0xff]
  %v41 = vld [vmem:[%s1 + $0x70] sm:$0xff]
  %v42 = vld [vmem:[%s0] sm:$0xf]
  %v43 = vld [vmem:[%s0 + $0x4] sm:$0xf]
  %v44 = vld [vmem:[%s0 + $0x8] sm:$0xf]
  %v45 = vld [vmem:[%s0 + $0xc] sm:$0xf]
  %v46 = vld [vmem:[%s0 + $0x10] sm:$0xf]
  %v47 = vld [vmem:[%s0 + $0x14] sm:$0xf]
  %v48 = vld [vmem:[%s0 + $0x18] sm:$0xf]
  %v49 = vld [vmem:[%s0 + $0x1c] sm:$0xf]
  %v50 = vld [vmem:[%s0 + $0x20] sm:$0xf]
  %v51 = vld [vmem:[%s0 + $0x24] sm:$0xf]
  %v52 = vld [vmem:[%s0 + $0x28] sm:$0xf]
  %v53 = vld [vmem:[%s0 + $0x2c] sm:$0xf]
  %v54 = vld [vmem:[%s0 + $0x30] sm:$0xf]
  %v55 = vld [vmem:[%s0 + $0x34] sm:$0xf]
  %v56 = vld [vmem:[%s0 + $0x38] sm:$0xf]
  %v57 = vld [vmem:[%s0 + $0x3c] sm:$0xf]
  %v58 = vld [vmem:[%s0 + $0x40] sm:$0xf]
  %v59 = vld [vmem:[%s0 + $0x44] sm:$0xf]
  %v60 = vld [vmem:[%s0 + $0x48] sm:$0xf]
  %v61 = vld [vmem:[%s0 + $0x4c] sm:$0xf]
  %v62 = vld [vmem:[%s0 + $0x50] sm:$0xf]
  %v63 = vld [vmem:[%s0 + $0x54] sm:$0xf]
  %v64 = vld [vmem:[%s0 + $0x58] sm:$0xf]
  %v65 = vld [vmem:[%s0 + $0x5c] sm:$0xf]
  %v66 = vld [vmem:[%s0 + $0x60] sm:$0xf]
  %v67 = vld [vmem:[%s0 + $0x64] sm:$0xf]
  %v68 = vld [vmem:[%s0 + $0x68] sm:$0xf]
  %v69 = vld [vmem:[%s0 + $0x6c] sm:$0xf]
  %v70 = vld [vmem:[%s0 + $0x70] sm:$0xf]
  %v71 = vld [vmem:[%s0 + $0x74] sm:$0xf]
  %v72 = vld [vmem:[%s0 + $0x78] sm:$0xf]
  %v73 = vld [vmem:[%s0 + $0x7c] sm:$0xf]
  %v74 = vld [vmem:[%s2] sm:$0xff]
  %v75 = vld [vmem:[%s2 + $0x8] sm:$0xff]
  %v76 = vld [vmem:[%s2 + $0x10] sm:$0xff]
  %v77 = vld [vmem:[%s2 + $0x18] sm:$0xff]
  %v78 = vld [vmem:[%s2 + $0x20] sm:$0xff]
  %v79 = vld [vmem:[%s2 + $0x28] sm:$0xff]
  %v80 = vld [vmem:[%s2 + $0x30] sm:$0xff]
  %v81 = vld [vmem:[%s2 + $0x38] sm:$0xff]
  %v82 = vld [vmem:[%s2 + $0x40] sm:$0xff]
  %v83 = vld [vmem:[%s2 + $0x48] sm:$0xff]
  %v84 = vld [vmem:[%s2 + $0x50] sm:$0xff]
  %v85 = vld [vmem:[%s2 + $0x58] sm:$0xff]
  %v86 = vld [vmem:[%s2 + $0x60] sm:$0xff]
  %v87 = vld [vmem:[%s2 + $0x68] sm:$0xff]
  %v88 = vld [vmem:[%s2 + $0x70] sm:$0xff]
  %90 = vset.pattern.permute.xlu0 0
  %91 = vperm.xlu0 %90, %v74
  %v92 = vpop.permute.xlu0 %91
  %95 = vset.pattern.permute.xlu0 0
  %96 = vperm.xlu0 %95, %v75
  %v97 = vpop.permute.xlu0 %96
  %100 = vset.pattern.permute.xlu0 0
  %101 = vperm.xlu0 %100, %v76
  %v102 = vpop.permute.xlu0 %101
  %105 = vset.pattern.permute.xlu0 0
  %106 = vperm.xlu0 %105, %v77
  %v107 = vpop.permute.xlu0 %106
  %110 = vset.pattern.permute.xlu0 0
  %111 = vperm.xlu0 %110, %v78
  %v112 = vpop.permute.xlu0 %111
  %115 = vset.pattern.permute.xlu0 0
  %116 = vperm.xlu0 %115, %v79
  %v117 = vpop.permute.xlu0 %116
  %120 = vset.pattern.permute.xlu0 0
  %121 = vperm.xlu0 %120, %v80
  %v122 = vpop.permute.xlu0 %121
  %125 = vset.pattern.permute.xlu0 0
  %126 = vperm.xlu0 %125, %v81
  %v127 = vpop.permute.xlu0 %126
  %130 = vset.pattern.permute.xlu0 0
  %131 = vperm.xlu0 %130, %v82
  %v132 = vpop.permute.xlu0 %131
  %135 = vset.pattern.permute.xlu0 0
  %136 = vperm.xlu0 %135, %v83
  %v137 = vpop.permute.xlu0 %136
  %140 = vset.pattern.permute.xlu0 0
  %141 = vperm.xlu0 %140, %v84
  %v142 = vpop.permute.xlu0 %141
  %145 = vset.pattern.permute.xlu0 0
  %146 = vperm.xlu0 %145, %v85
  %v147 = vpop.permute.xlu0 %146
  %150 = vset.pattern.permute.xlu0 0
  %151 = vperm.xlu0 %150, %v86
  %v152 = vpop.permute.xlu0 %151
  %155 = vset.pattern.permute.xlu0 0
  %156 = vperm.xlu0 %155, %v87
  %v157 = vpop.permute.xlu0 %156
  %160 = vset.pattern.permute.xlu0 0
  %161 = vperm.xlu0 %160, %v88
  %v162 = vpop.permute.xlu0 %161
  %v179 = vunpack.c.l.b16 %v27
  %v180 = vunpack.c.h.b16 %v27
  %v181 = vunpack.c.l.b16 %v28
  %v182 = vunpack.c.h.b16 %v28
  %v183 = vunpack.c.l.b16 %v29
  %v184 = vunpack.c.h.b16 %v29
  %v185 = vunpack.c.l.b16 %v30
  %v186 = vunpack.c.h.b16 %v30
  %v187 = vunpack.c.l.b16 %v31
  %v188 = vunpack.c.h.b16 %v31
  %v189 = vunpack.c.l.b16 %v32
  %v190 = vunpack.c.h.b16 %v32
  %v191 = vunpack.c.l.b16 %v33
  %v192 = vunpack.c.h.b16 %v33
  %v193 = vunpack.c.l.b16 %v34
  %v194 = vunpack.c.h.b16 %v34
  %v195 = vunpack.c.l.b16 %v35
  %v196 = vunpack.c.h.b16 %v35
  %v197 = vunpack.c.l.b16 %v36
  %v198 = vunpack.c.h.b16 %v36
  %v199 = vunpack.c.l.b16 %v37
  %v200 = vunpack.c.h.b16 %v37
  %v201 = vunpack.c.l.b16 %v38
  %v202 = vunpack.c.h.b16 %v38
  %v203 = vunpack.c.l.b16 %v39
  %v204 = vunpack.c.h.b16 %v39
  %v205 = vunpack.c.l.b16 %v40
  %v206 = vunpack.c.h.b16 %v40
  %v207 = vunpack.c.l.b16 %v41
  %v208 = vunpack.c.h.b16 %v41
  %v209 = vpack.c.b16 %v181, %v179
  %v210 = vpack.c.b16 %v182, %v180
  %v211 = vpack.c.b16 %v185, %v183
  %v212 = vpack.c.b16 %v186, %v184
  %v213 = vpack.c.b16 %v189, %v187
  %v214 = vpack.c.b16 %v190, %v188
  %v215 = vpack.c.b16 %v193, %v191
  %v216 = vpack.c.b16 %v194, %v192
  %v217 = vpack.c.b16 %v197, %v195
  %v218 = vpack.c.b16 %v198, %v196
  %v219 = vpack.c.b16 %v201, %v199
  %v220 = vpack.c.b16 %v202, %v200
  %v221 = vpack.c.b16 %v205, %v203
  %v222 = vpack.c.b16 %v206, %v204
  %v223 = vpack.c.b16 %v207, %v207
  %v224 = vpack.c.b16 %v208, %v208
  %v273 = vunpack.c.l.b16 %v42
  %v274 = vunpack.c.l.b16 %v43
  %v275 = vunpack.c.l.b16 %v44
  %v276 = vunpack.c.l.b16 %v45
  %v277 = vunpack.c.l.b16 %v46
  %v278 = vunpack.c.l.b16 %v47
  %v279 = vunpack.c.l.b16 %v48
  %v280 = vunpack.c.l.b16 %v49
  %v281 = vunpack.c.l.b16 %v50
  %v282 = vunpack.c.l.b16 %v51
  %v283 = vunpack.c.l.b16 %v52
  %v284 = vunpack.c.l.b16 %v53
  %v285 = vunpack.c.l.b16 %v54
  %v286 = vunpack.c.l.b16 %v55
  %v287 = vunpack.c.l.b16 %v56
  %v288 = vunpack.c.l.b16 %v57
  %v289 = vunpack.c.l.b16 %v58
  %v290 = vunpack.c.l.b16 %v59
  %v291 = vunpack.c.l.b16 %v60
  %v292 = vunpack.c.l.b16 %v61
  %v293 = vunpack.c.l.b16 %v62
  %v294 = vunpack.c.l.b16 %v63
  %v295 = vunpack.c.l.b16 %v64
  %v296 = vunpack.c.l.b16 %v65
  %v297 = vunpack.c.l.b16 %v66
  %v298 = vunpack.c.l.b16 %v67
  %v299 = vunpack.c.l.b16 %v68
  %v300 = vunpack.c.l.b16 %v69
  %v301 = vunpack.c.l.b16 %v70
  %v302 = vunpack.c.l.b16 %v71
  %v303 = vunpack.c.l.b16 %v72
  %v304 = vunpack.c.l.b16 %v73
  %v305 = vpack.c.b16 %v274, %v273
  %v306 = vpack.c.b16 %v276, %v275
  %v307 = vpack.c.b16 %v278, %v277
  %v308 = vpack.c.b16 %v280, %v279
  %v309 = vpack.c.b16 %v282, %v281
  %v310 = vpack.c.b16 %v284, %v283
  %v311 = vpack.c.b16 %v286, %v285
  %v312 = vpack.c.b16 %v288, %v287
  %v313 = vpack.c.b16 %v290, %v289
  %v314 = vpack.c.b16 %v292, %v291
  %v315 = vpack.c.b16 %v294, %v293
  %v316 = vpack.c.b16 %v296, %v295
  %v317 = vpack.c.b16 %v298, %v297
  %v318 = vpack.c.b16 %v300, %v299
  %v319 = vpack.c.b16 %v302, %v301
  %v320 = vpack.c.b16 %v304, %v303
  %337 = vmatprep.subr.bf16.mxu0 0
  %338 = vmatpush1.bf16.msra.mxu0 %v305
  %339 = vmatprep.subr.bf16.mxu0 0
  %340 = vmatpush1.bf16.msra.mxu0 %v306
  %341 = vmatprep.subr.bf16.mxu0 0
  %342 = vmatpush1.bf16.msra.mxu0 %v307
  %343 = vmatprep.subr.bf16.mxu0 0
  %344 = vmatpush1.bf16.msra.mxu0 %v308
  %345 = vmatprep.subr.bf16.mxu0 0
  %346 = vmatpush1.bf16.msra.mxu0 %v309
  %347 = vmatprep.subr.bf16.mxu0 0
  %348 = vmatpush1.bf16.msra.mxu0 %v310
  %349 = vmatprep.subr.bf16.mxu0 0
  %350 = vmatpush1.bf16.msra.mxu0 %v311
  %351 = vmatprep.subr.bf16.mxu0 0
  %352 = vmatpush1.bf16.msra.mxu0 %v312
  %353 = vmatprep.subr.bf16.mxu0 0
  %354 = vmatpush1.bf16.msra.mxu0 %v313
  %355 = vmatprep.subr.bf16.mxu0 0
  %356 = vmatpush1.bf16.msra.mxu0 %v314
  %357 = vmatprep.subr.bf16.mxu0 0
  %358 = vmatpush1.bf16.msra.mxu0 %v315
  %359 = vmatprep.subr.bf16.mxu0 0
  %360 = vmatpush1.bf16.msra.mxu0 %v316
  %361 = vmatprep.subr.bf16.mxu0 0
  %362 = vmatpush1.bf16.msra.mxu0 %v317
  %363 = vmatprep.subr.bf16.mxu0 0
  %364 = vmatpush1.bf16.msra.mxu0 %v318
  %365 = vmatprep.subr.bf16.mxu0 0
  %366 = vmatpush1.bf16.msra.mxu0 %v319
  %367 = vmatprep.subr.bf16.mxu0 0
  %368 = vmatpush1.bf16.msra.mxu0 %v320
  %369 = vmatprep.mubr.bf16.mxu0 %v210
  %370 = vmatmul.mubr.bf16.gmra.mrb[0].mxu0 %v209
  %v371 = vpop.f32.mrb[0].mxu0
  %v372 = vadd.f32 %v92, %v371
  %v373 = vpop.f32.mrb[0].mxu0
  %v374 = vpop.f32.mrb[0].mxu0
  %v375 = vadd.f32 %v97, %v374
  %v376 = vpop.f32.mrb[0].mxu0
  %377 = vmatprep.mubr.bf16.mxu0 %v212
  %378 = vmatmul.mubr.bf16.gmra.mrb[0].mxu0 %v211
  %v379 = vpop.f32.mrb[0].mxu0
  %v380 = vadd.f32 %v102, %v379
  %v381 = vpop.f32.mrb[0].mxu0
  %v382 = vpop.f32.mrb[0].mxu0
  %v383 = vadd.f32 %v107, %v382
  %v384 = vpop.f32.mrb[0].mxu0
  %385 = vmatprep.mubr.bf16.mxu0 %v214
  %386 = vmatmul.mubr.bf16.gmra.mrb[0].mxu0 %v213
  %v387 = vpop.f32.mrb[0].mxu0
  %v388 = vadd.f32 %v112, %v387
  %v389 = vpop.f32.mrb[0].mxu0
  %v390 = vpop.f32.mrb[0].mxu0
  %v391 = vadd.f32 %v117, %v390
  %v392 = vpop.f32.mrb[0].mxu0
  %393 = vmatprep.mubr.bf16.mxu0 %v216
  %394 = vmatmul.mubr.bf16.gmra.mrb[0].mxu0 %v215
  %v395 = vpop.f32.mrb[0].mxu0
  %v396 = vadd.f32 %v122, %v395
  %v397 = vpop.f32.mrb[0].mxu0
  %v398 = vpop.f32.mrb[0].mxu0
  %v399 = vadd.f32 %v127, %v398
  %v400 = vpop.f32.mrb[0].mxu0
  %401 = vmatprep.mubr.bf16.mxu0 %v218
  %402 = vmatmul.mubr.bf16.gmra.mrb[0].mxu0 %v217
  %v403 = vpop.f32.mrb[0].mxu0
  %v404 = vadd.f32 %v132, %v403
  %v405 = vpop.f32.mrb[0].mxu0
  %v406 = vpop.f32.mrb[0].mxu0
  %v407 = vadd.f32 %v137, %v406
  %v408 = vpop.f32.mrb[0].mxu0
  %409 = vmatprep.mubr.bf16.mxu0 %v220
  %410 = vmatmul.mubr.bf16.gmra.mrb[0].mxu0 %v219
  %v411 = vpop.f32.mrb[0].mxu0
  %v412 = vadd.f32 %v142, %v411
  %v413 = vpop.f32.mrb[0].mxu0
  %v414 = vpop.f32.mrb[0].mxu0
  %v415 = vadd.f32 %v147, %v414
  %v416 = vpop.f32.mrb[0].mxu0
  %417 = vmatprep.mubr.bf16.mxu0 %v222
  %418 = vmatmul.mubr.bf16.gmra.mrb[0].mxu0 %v221
  %v419 = vpop.f32.mrb[0].mxu0
  %v420 = vadd.f32 %v152, %v419
  %v421 = vpop.f32.mrb[0].mxu0
  %v422 = vpop.f32.mrb[0].mxu0
  %v423 = vadd.f32 %v157, %v422
  %v424 = vpop.f32.mrb[0].mxu0
  %425 = vmatprep.mubr.bf16.mxu0 %v224
  %426 = vmatmul.mubr.bf16.gmra.mrb[0].mxu0 %v223
  %v427 = vpop.f32.mrb[0].mxu0
  %v428 = vadd.f32 %v162, %v427
  %v429 = vpop.f32.mrb[0].mxu0
  %v430 = vpop.f32.mrb[0].mxu0
  %v431 = vpop.f32.mrb[0].mxu0
  %432 = vdwg.mxu0
  %v433 = vmax.f32 %v372, 0.0
  %v434 = vmax.f32 %v375, 0.0
  %v435 = vmax.f32 %v380, 0.0
  %v436 = vmax.f32 %v383, 0.0
  %v437 = vmax.f32 %v388, 0.0
  %v438 = vmax.f32 %v391, 0.0
  %v439 = vmax.f32 %v396, 0.0
  %v440 = vmax.f32 %v399, 0.0
  %v441 = vmax.f32 %v404, 0.0
  %v442 = vmax.f32 %v407, 0.0
  %v443 = vmax.f32 %v412, 0.0
  %v444 = vmax.f32 %v415, 0.0
  %v445 = vmax.f32 %v420, 0.0
  %v446 = vmax.f32 %v423, 0.0
  %v447 = vmax.f32 %v428, 0.0
  %v448 = vld [vmem:[%s3] sm:$0xf]
  %v449 = vld [vmem:[%s3 + $0x4] sm:$0xf]
  %v450 = vld [vmem:[%s3 + $0x8] sm:$0xf]
  %v451 = vld [vmem:[%s3 + $0xc] sm:$0xf]
  %v452 = vld [vmem:[%s3 + $0x10] sm:$0xf]
  %v453 = vld [vmem:[%s3 + $0x14] sm:$0xf]
  %v454 = vld [vmem:[%s3 + $0x18] sm:$0xf]
  %v455 = vld [vmem:[%s3 + $0x1c] sm:$0xf]
  %v456 = vld [vmem:[%s3 + $0x20] sm:$0xf]
  %v457 = vld [vmem:[%s3 + $0x24] sm:$0xf]
  %v458 = vld [vmem:[%s3 + $0x28] sm:$0x3]
  %v459 = vpack.c.bf16 %v434, %v433
  %v460 = vpack.c.bf16 %v436, %v435
  %v461 = vpack.c.bf16 %v438, %v437
  %v462 = vpack.c.bf16 %v440, %v439
  %v463 = vpack.c.bf16 %v442, %v441
  %v464 = vpack.c.bf16 %v444, %v443
  %v465 = vpack.c.bf16 %v446, %v445
  %v466 = vpack.c.bf16 %v447, %v447
  %v467 = vld [vmem:[%s4] sm:$0xff]
  %v468 = vld [vmem:[%s4 + $0x8] sm:$0xff]
  %v469 = vld [vmem:[%s4 + $0x10] sm:$0xff]
  %v470 = vld [vmem:[%s4 + $0x18] sm:$0xff]
  %v471 = vld [vmem:[%s4 + $0x20] sm:$0xff]
  %v472 = vld [vmem:[%s4 + $0x28] sm:$0xff]
  %v473 = vld [vmem:[%s4 + $0x30] sm:$0xff]
  %v474 = vld [vmem:[%s4 + $0x38] sm:$0xff]
  %v475 = vld [vmem:[%s4 + $0x40] sm:$0xff]
  %v476 = vld [vmem:[%s4 + $0x48] sm:$0xff]
  %v477 = vld [vmem:[%s4 + $0x50] sm:$0xf]
  %479 = vset.pattern.permute.xlu0 0
  %480 = vperm.xlu0 %479, %v467
  %v481 = vpop.permute.xlu0 %480
  %484 = vset.pattern.permute.xlu0 0
  %485 = vperm.xlu0 %484, %v468
  %v486 = vpop.permute.xlu0 %485
  %489 = vset.pattern.permute.xlu0 0
  %490 = vperm.xlu0 %489, %v469
  %v491 = vpop.permute.xlu0 %490
  %494 = vset.pattern.permute.xlu0 0
  %495 = vperm.xlu0 %494, %v470
  %v496 = vpop.permute.xlu0 %495
  %499 = vset.pattern.permute.xlu0 0
  %500 = vperm.xlu0 %499, %v471
  %v501 = vpop.permute.xlu0 %500
  %504 = vset.pattern.permute.xlu0 0
  %505 = vperm.xlu0 %504, %v472
  %v506 = vpop.permute.xlu0 %505
  %509 = vset.pattern.permute.xlu0 0
  %510 = vperm.xlu0 %509, %v473
  %v511 = vpop.permute.xlu0 %510
  %514 = vset.pattern.permute.xlu0 0
  %515 = vperm.xlu0 %514, %v474
  %v516 = vpop.permute.xlu0 %515
  %519 = vset.pattern.permute.xlu0 0
  %520 = vperm.xlu0 %519, %v475
  %v521 = vpop.permute.xlu0 %520
  %524 = vset.pattern.permute.xlu0 0
  %525 = vperm.xlu0 %524, %v476
  %v526 = vpop.permute.xlu0 %525
  %529 = vset.pattern.permute.xlu0 0
  %530 = vperm.xlu0 %529, %v477
  %v531 = vpop.permute.xlu0 %530
  %v544 = vunpack.c.l.b16 %v448
  %v545 = vunpack.c.l.b16 %v449
  %v546 = vunpack.c.l.b16 %v450
  %v547 = vunpack.c.l.b16 %v451
  %v548 = vunpack.c.l.b16 %v452
  %v549 = vunpack.c.l.b16 %v453
  %v550 = vunpack.c.l.b16 %v454
  %v551 = vunpack.c.l.b16 %v455
  %v552 = vunpack.c.l.b16 %v456
  %v553 = vunpack.c.l.b16 %v457
  %v554 = vunpack.c.l.b16 %v458
  %v555 = vpack.c.b16 %v545, %v544
  %v556 = vpack.c.b16 %v547, %v546
  %v557 = vpack.c.b16 %v549, %v548
  %v558 = vpack.c.b16 %v551, %v550
  %v559 = vpack.c.b16 %v553, %v552
  %v560 = vpack.c.b16 %v554, %v554
  %vm561 = vcmask 982016
  %v563 = vsel %vm561, %v555, 0
  %v566 = vsel %vm561, %v556, 0
  %v569 = vsel %vm561, %v557, 0
  %v572 = vsel %vm561, %v558, 0
  %v575 = vsel %vm561, %v559, 0
  %v578 = vsel %vm561, %v560, 0
  %vm580 = vcmask 1043456
  %v582 = vsel %vm580, %v466, 0
  %584 = vmatprep.subr.bf16.mxu0 0
  %585 = vmatpush1.bf16.msra.mxu0 %v459
  %586 = vmatprep.subr.bf16.mxu0 0
  %587 = vmatpush1.bf16.msra.mxu0 %v460
  %588 = vmatprep.subr.bf16.mxu0 0
  %589 = vmatpush1.bf16.msra.mxu0 %v461
  %590 = vmatprep.subr.bf16.mxu0 0
  %591 = vmatpush1.bf16.msra.mxu0 %v462
  %592 = vmatprep.subr.bf16.mxu0 0
  %593 = vmatpush1.bf16.msra.mxu0 %v463
  %594 = vmatprep.subr.bf16.mxu0 0
  %595 = vmatpush1.bf16.msra.mxu0 %v464
  %596 = vmatprep.subr.bf16.mxu0 0
  %597 = vmatpush1.bf16.msra.mxu0 %v465
  %598 = vmatprep.subr.bf16.mxu0 0
  %599 = vmatpush1.bf16.msra.mxu0 %v582
  %600 = vmatprep.subr.bf16.mxu0 0
  %601 = vmatpush1.bf16.msra.mxu0 0
  %602 = vmatprep.subr.bf16.mxu0 0
  %603 = vmatpush1.bf16.msra.mxu0 0
  %604 = vmatprep.subr.bf16.mxu0 0
  %605 = vmatpush1.bf16.msra.mxu0 0
  %606 = vmatprep.subr.bf16.mxu0 0
  %607 = vmatpush1.bf16.msra.mxu0 0
  %608 = vmatprep.subr.bf16.mxu0 0
  %609 = vmatpush1.bf16.msra.mxu0 0
  %610 = vmatprep.subr.bf16.mxu0 0
  %611 = vmatpush1.bf16.msra.mxu0 0
  %612 = vmatprep.subr.bf16.mxu0 0
  %613 = vmatpush1.bf16.msra.mxu0 0
  %614 = vmatprep.subr.bf16.mxu0 0
  %615 = vmatpush1.bf16.msra.mxu0 0
  %616 = vmatprep.mubr.bf16.mxu0 0
  %617 = vmatmul.mubr.bf16.gmra.mrb[0].mxu0 %v563
  %v618 = vpop.f32.mrb[0].mxu0
  %v619 = vadd.f32 %v481, %v618
  %v620 = vpop.f32.mrb[0].mxu0
  %v621 = vpop.f32.mrb[0].mxu0
  %v622 = vadd.f32 %v486, %v621
  %v623 = vpop.f32.mrb[0].mxu0
  %624 = vmatprep.mubr.bf16.mxu0 0
  %625 = vmatmul.mubr.bf16.gmra.mrb[0].mxu0 %v566
  %v626 = vpop.f32.mrb[0].mxu0
  %v627 = vadd.f32 %v491, %v626
  %v628 = vpop.f32.mrb[0].mxu0
  %v629 = vpop.f32.mrb[0].mxu0
  %v630 = vadd.f32 %v496, %v629
  %v631 = vpop.f32.mrb[0].mxu0
  %632 = vmatprep.mubr.bf16.mxu0 0
  %633 = vmatmul.mubr.bf16.gmra.mrb[0].mxu0 %v569
  %v634 = vpop.f32.mrb[0].mxu0
  %v635 = vadd.f32 %v501, %v634
  %v636 = vpop.f32.mrb[0].mxu0
  %v637 = vpop.f32.mrb[0].mxu0
  %v638 = vadd.f32 %v506, %v637
  %v639 = vpop.f32.mrb[0].mxu0
  %640 = vmatprep.mubr.bf16.mxu0 0
  %641 = vmatmul.mubr.bf16.gmra.mrb[0].mxu0 %v572
  %v642 = vpop.f32.mrb[0].mxu0
  %v643 = vadd.f32 %v511, %v642
  %v644 = vpop.f32.mrb[0].mxu0
  %v645 = vpop.f32.mrb[0].mxu0
  %v646 = vadd.f32 %v516, %v645
  %v647 = vpop.f32.mrb[0].mxu0
  %648 = vmatprep.mubr.bf16.mxu0 0
  %649 = vmatmul.mubr.bf16.gmra.mrb[0].mxu0 %v575
  %v650 = vpop.f32.mrb[0].mxu0
  %v651 = vadd.f32 %v521, %v650
  %v652 = vpop.f32.mrb[0].mxu0
  %v653 = vpop.f32.mrb[0].mxu0
  %v654 = vadd.f32 %v526, %v653
  %v655 = vpop.f32.mrb[0].mxu0
  %656 = vmatprep.mubr.bf16.mxu0 0
  %657 = vmatmul.mubr.bf16.gmra.mrb[0].mxu0 %v578
  %v658 = vpop.f32.mrb[0].mxu0
  %v659 = vadd.f32 %v531, %v658
  %v660 = vpop.f32.mrb[0].mxu0
  %v661 = vpop.f32.mrb[0].mxu0
  %v662 = vpop.f32.mrb[0].mxu0
  %663 = vdwg.mxu0
  %v664 = vmax.f32 %v619, 0.0
  %v665 = vmax.f32 %v622, 0.0
  %v666 = vmax.f32 %v627, 0.0
  %v667 = vmax.f32 %v630, 0.0
  %v668 = vmax.f32 %v635, 0.0
  %v669 = vmax.f32 %v638, 0.0
  %v670 = vmax.f32 %v643, 0.0
  %v671 = vmax.f32 %v646, 0.0
  %v672 = vmax.f32 %v651, 0.0
  %v673 = vmax.f32 %v654, 0.0
  %v674 = vmax.f32 %v659, 0.0
  %v675 = vld [vmem:[%s5] sm:$0xf]
  %v676 = vld [vmem:[%s5 + $0x4] sm:$0x1]
  %v677 = vpack.c.bf16 %v665, %v664
  %v678 = vpack.c.bf16 %v667, %v666
  %v679 = vpack.c.bf16 %v669, %v668
  %v680 = vpack.c.bf16 %v671, %v670
  %v681 = vpack.c.bf16 %v673, %v672
  %v682 = vpack.c.bf16 %v674, %v674
  %v683 = vld [vmem:[%s6] sm:$0xff]
  %v684 = vld [vmem:[%s6 + $0x8] sm:$0x3]
  %686 = vset.pattern.permute.xlu0 0
  %687 = vperm.xlu0 %686, %v683
  %v688 = vpop.permute.xlu0 %687
  %691 = vset.pattern.permute.xlu0 0
  %692 = vperm.xlu0 %691, %v684
  %v693 = vpop.permute.xlu0 %692
  %v697 = vunpack.c.l.b16 %v675
  %v698 = vunpack.c.l.b16 %v676
  %v699 = vpack.c.b16 %v698, %v697
  %vm700 = vcmask 687104
  %v702 = vsel %vm700, %v699, 0
  %vm704 = vcmask 1041408
  %v706 = vsel %vm704, %v682, 0
  %708 = vmatprep.subr.bf16.mxu0 0
  %709 = vmatpush1.bf16.msra.mxu0 %v677
  %710 = vmatprep.subr.bf16.mxu0 0
  %711 = vmatpush1.bf16.msra.mxu0 %v678
  %712 = vmatprep.subr.bf16.mxu0 0
  %713 = vmatpush1.bf16.msra.mxu0 %v679
  %714 = vmatprep.subr.bf16.mxu0 0
  %715 = vmatpush1.bf16.msra.mxu0 %v680
  %716 = vmatprep.subr.bf16.mxu0 0
  %717 = vmatpush1.bf16.msra.mxu0 %v681
  %718 = vmatprep.subr.bf16.mxu0 0
  %719 = vmatpush1.bf16.msra.mxu0 %v706
  %720 = vmatprep.subr.bf16.mxu0 0
  %721 = vmatpush1.bf16.msra.mxu0 0
  %722 = vmatprep.subr.bf16.mxu0 0
  %723 = vmatpush1.bf16.msra.mxu0 0
  %724 = vmatprep.subr.bf16.mxu0 0
  %725 = vmatpush1.bf16.msra.mxu0 0
  %726 = vmatprep.subr.bf16.mxu0 0
  %727 = vmatpush1.bf16.msra.mxu0 0
  %728 = vmatprep.subr.bf16.mxu0 0
  %729 = vmatpush1.bf16.msra.mxu0 0
  %730 = vmatprep.subr.bf16.mxu0 0
  %731 = vmatpush1.bf16.msra.mxu0 0
  %732 = vmatprep.subr.bf16.mxu0 0
  %733 = vmatpush1.bf16.msra.mxu0 0
  %734 = vmatprep.subr.bf16.mxu0 0
  %735 = vmatpush1.bf16.msra.mxu0 0
  %736 = vmatprep.subr.bf16.mxu0 0
  %737 = vmatpush1.bf16.msra.mxu0 0
  %738 = vmatprep.subr.bf16.mxu0 0
  %739 = vmatpush1.bf16.msra.mxu0 0
  %740 = vmatprep.mubr.bf16.mxu0 0
  %741 = vmatmul.mubr.bf16.gmra.mrb[0].mxu0 %v702
  %v742 = vpop.f32.mrb[0].mxu0
  %v743 = vadd.f32 %v688, %v742
  %v744 = vpop.f32.mrb[0].mxu0
  %v745 = vpop.f32.mrb[0].mxu0
  %v746 = vadd.f32 %v693, %v745
  %v747 = vpop.f32.mrb[0].mxu0
  %748 = vdwg.mxu0
  %749 = vst [vmem:[%s7] sm:$0xff] %v743
  %750 = vst [vmem:[%s7 + $0x8] sm:$0x3] %v746
  // Predicated region
  $region30: #{net_forward.5} parent=0 // pred_check
    _
  $region31: #{net_forward.5} parent=0 // pred_check_branch
    %752 = sbr.rel (0) target = $region33
  $region32: #{net_forward.5} parent=0 // pred_region
    _
  $region33: #{net_forward.5} parent=0 // pred_fallthru
    _
  // Predicated region
  $region34: #{net_forward.5} parent=0 // pred_check
    _
  $region35: #{net_forward.5} parent=0 // pred_check_branch
    %754 = sbr.rel (0) target = $region37
  $region36: #{net_forward.5} parent=0 // pred_region
    _
  $region37: #{net_forward.5} parent=0 // pred_fallthru
    _

</llo_original>
